<compile_context>
chip_gen: v6e
topology: v6e:2x2x1
jax: 0.10.0
libtpu: 0.0.40
codegen_flags: <defaults>
</compile_context>

<pallas_src>
import functools

import jax
import jax.numpy as jnp
from jax.experimental import pallas as pl
from jax.experimental.pallas import tpu as pltpu


# ----------------------------- config ----------------------------------------
class Config:
    appearance_embedding_dim = 32
    app_per_gauss = True
    appearance_n_fourier_freqs = 4


FEAT_IN = 3
HIDDEN = 128
OUT_DIM = FEAT_IN * 2          # 6 useful output columns
OUT_COLS = 8                   # stored output columns (6 zero-padded to 8)
SCALE = 0.01
_LANE = 128


def _round_up(x, m):
    return (x + m - 1) // m * m


# ----------------------------- hw queries -------------------------------------
@functools.lru_cache(maxsize=None)
def _vmem_capacity_bytes():
    try:
        return int(pltpu.get_tpu_info().vmem_capacity_bytes)
    except Exception:
        return 64 * 2**20          # conservative: v7x per-TensorCore VMEM


@functools.lru_cache(maxsize=None)
def _num_tensorcores_per_device():
    # v7x exposes 2 TensorCores per device; v5e / v6e have 1.
    try:
        kind = jax.devices()[0].device_kind.lower()
        return 2 if "v7" in kind else 1
    except Exception:
        return 1


# ----------------------------- kernels ----------------------------------------
def _relu_bf16(x):
    return jnp.maximum(x, 0.0).astype(jnp.bfloat16)


def _mlp_tail(h1_acc, b1, w2, b2, w3, b3, o_ref):
    # h1_acc: (tile, 128) f32 pre-bias first-layer accumulation.
    h1 = _relu_bf16(h1_acc + b1)
    h2 = _relu_bf16(jnp.dot(h1, w2, preferred_element_type=jnp.float32) + b2)
    # *0.01 already folded into w3/b3; columns >= OUT_DIM are zero-padded.
    out = jnp.dot(h2, w3, preferred_element_type=jnp.float32) + b3
    o_ref[...] = out.astype(o_ref.dtype)


def _mlp_fused_kernel(dc_ref, ge_ref, ae_ref,
                      w1a_ref, w1b_ref, w1c_ref, b1_ref,
                      w2_ref, b2_ref, w3_ref, b3_ref, o_ref):
    # concat(features_dc, gembedding, aembedding) @ w1
    #   == dc @ w1[:3] + ge @ w1[3:27] + ae @ w1[27:]
    # Inputs arrive as f32 straight from HBM; the bf16 cast runs on the VPU
    # here (free slack) instead of as a separate wrapper-side HBM pass.
    dc = dc_ref[...].astype(jnp.bfloat16)
    ge = ge_ref[...].astype(jnp.bfloat16)
    ae = ae_ref[...].astype(jnp.bfloat16)
    h1 = jnp.dot(dc, w1a_ref[...], preferred_element_type=jnp.float32)
    h1 = h1 + jnp.dot(ge, w1b_ref[...], preferred_element_type=jnp.float32)
    h1 = h1 + jnp.dot(ae, w1c_ref[...], preferred_element_type=jnp.float32)
    _mlp_tail(h1, b1_ref[...], w2_ref[...], b2_ref[...], w3_ref[...], b3_ref[...],
              o_ref)


def _mlp_single_kernel(x_ref, w1_ref, b1_ref, w2_ref, b2_ref, w3_ref, b3_ref,
                       o_ref):
    # app_per_gauss == False path: input is aembedding alone.
    x = x_ref[...].astype(jnp.bfloat16)
    h1 = jnp.dot(x, w1_ref[...], preferred_element_type=jnp.float32)
    _mlp_tail(h1, b1_ref[...], w2_ref[...], b2_ref[...], w3_ref[...], b3_ref[...],
              o_ref)


# ----------------------------- VMEM / tile sizing ------------------------------
def _per_row_vmem_bytes(input_dims, input_buffering):
    """Scoped-VMEM bytes per tile row, with every last dim lane-padded to 128."""
    lanes = lambda d: _round_up(d, _LANE)
    b = 0
    for d in input_dims:
        b += input_buffering * lanes(d) * 4       # f32 input pipeline buffers
        b += lanes(d) * 2                         # in-kernel bf16 cast copy
    b += 2 * lanes(OUT_COLS) * 4                  # double-buffered f32 output
    # intermediates: h1 f32 + bf16, h2 f32 + bf16, pre-store f32 result
    b += _LANE * (4 + 2 + 4 + 2) + lanes(OUT_COLS) * 4
    return b


def _weights_vmem_bytes(weights):
    b = 0
    for w in weights:
        r, c = w.shape
        b += 2 * _round_up(r, 8) * _round_up(c, _LANE) * w.dtype.itemsize
    return b


def _pick_tile(n, requested, max_tile_vmem, num_tc):
    tile = max(512, (min(requested, max_tile_vmem) // 512) * 512)
    if num_tc >= 2 and n >= num_tc * 512:
        # Keep >= num_tc grid steps so the single "parallel" grid axis can
        # shard across TensorCores (v7x only; on single-TC chips a forced
        # split just adds a pipeline step).
        tile = min(tile, _round_up(pl.cdiv(n, num_tc), 512))
    if n <= tile:
        # One block covers everything: shrink to the work actually present.
        tile = _round_up(max(n, 16), 16)
    return tile


# ----------------------------- pallas_call wrapper -----------------------------
def _run_mlp(kernel, inputs, weights, *, tile_n, input_buffering):
    """inputs: list of [N, d_i] f32 row-streamed arrays (tiled over N).
       weights: small prepared arrays passed as full blocks every grid step."""
    n = inputs[0].shape[0]
    input_dims = [x.shape[1] for x in inputs]

    per_row = _per_row_vmem_bytes(input_dims, input_buffering)
    w_bytes = _weights_vmem_bytes(weights)
    budget = max(8 * 2**20, _vmem_capacity_bytes() - 16 * 2**20)   # headroom
    max_tile_vmem = max(512,
                        (int((budget - w_bytes) / (per_row * 1.15)) // 512) * 512)
    tile = _pick_tile(n, tile_n, max_tile_vmem, _num_tensorcores_per_device())
    grid = (pl.cdiv(n, tile),)

    need = tile * per_row + w_bytes
    vmem_limit = int(min(budget, max(16 * 2**20, int(1.25 * need))))

    row_map = lambda i: (i, 0)
    full_map = lambda i: (0, 0)

    if input_buffering == 2:
        in_specs = [pl.BlockSpec((tile, d), row_map) for d in input_dims]
    else:
        # e.g. input_buffering=3 on v5e if xprof shows exposed input DMA.
        in_specs = [pl.BlockSpec((tile, d), row_map,
                                 pipeline_mode=pl.Buffered(input_buffering))
                    for d in input_dims]
    in_specs += [pl.BlockSpec(w.shape, full_map) for w in weights]

    out = pl.pallas_call(
        kernel,
        out_shape=jax.ShapeDtypeStruct((n, OUT_COLS), jnp.float32),
        grid_spec=pltpu.PrefetchScalarGridSpec(
            num_scalar_prefetch=0,
            grid=grid,
            in_specs=in_specs,
            out_specs=pl.BlockSpec((tile, OUT_COLS), row_map),
        ),
        compiler_params=pltpu.CompilerParams(
            dimension_semantics=("parallel",),
            vmem_limit_bytes=vmem_limit,
        ),
    )(*inputs, *weights)
    return out


# ----------------------------- params -----------------------------------------
def init_params(key, input_dim):
    """Matches nn.Linear shapes; stored transposed as [d_in, d_out]."""
    ks = jax.random.split(key, 6)

    def linear(kw, kb, d_in, d_out):
        bound = 1.0 / jnp.sqrt(d_in)
        w = jax.random.uniform(kw, (d_in, d_out), jnp.float32, -bound, bound)
        b = jax.random.uniform(kb, (1, d_out), jnp.float32, -bound, bound)
        return w, b

    w1, b1 = linear(ks[0], ks[1], input_dim, HIDDEN)
    w2, b2 = linear(ks[2], ks[3], HIDDEN, HIDDEN)
    w3, b3 = linear(ks[4], ks[5], HIDDEN, OUT_DIM)
    return (w1, b1, w2, b2, w3, b3)


def prepare_kernel_params(params, config):
    """One-time weight prep: bf16 weights / f32 biases, *0.01 folded into layer
    3, layer-3 output zero-padded 6->8 columns, and w1 pre-split into the three
    row slices used by the fused (split-concat) first layer."""
    w1, b1, w2, b2, w3, b3 = params
    w3p = jnp.zeros((HIDDEN, OUT_COLS), jnp.float32).at[:, :OUT_DIM].set(w3 * SCALE)
    b3p = jnp.zeros((1, OUT_COLS), jnp.float32).at[:, :OUT_DIM].set(b3 * SCALE)
    kp = dict(b1=b1, w2=w2.astype(jnp.bfloat16), b2=b2,
              w3=w3p.astype(jnp.bfloat16), b3=b3p)
    if config.app_per_gauss:
        d_dc = FEAT_IN
        d_ge = 6 * config.appearance_n_fourier_freqs
        kp["w1a"] = w1[:d_dc].astype(jnp.bfloat16)
        kp["w1b"] = w1[d_dc:d_dc + d_ge].astype(jnp.bfloat16)
        kp["w1c"] = w1[d_dc + d_ge:].astype(jnp.bfloat16)
    else:
        kp["w1"] = w1.astype(jnp.bfloat16)
    return kp


# ----------------------------- module forward ----------------------------------
def embedding_model_forward(kernel_params, gembedding, aembedding, features_dc,
                            viewdir=None, *, app_per_gauss=True,
                            tile_n=8192, input_buffering=2):
    """Mirrors EmbeddingModel.forward: returns (offset, mul), each [N, 3].
    `kernel_params` must come from prepare_kernel_params (called once)."""
    del viewdir
    kp = kernel_params
    if app_per_gauss and gembedding is not None:
        weights = [kp["w1a"], kp["w1b"], kp["w1c"], kp["b1"],
                   kp["w2"], kp["b2"], kp["w3"], kp["b3"]]
        out = _run_mlp(_mlp_fused_kernel,
                       [features_dc, gembedding, aembedding], weights,
                       tile_n=tile_n, input_buffering=input_buffering)
    else:
        weights = [kp["w1"], kp["b1"], kp["w2"], kp["b2"], kp["w3"], kp["b3"]]
        out = _run_mlp(_mlp_single_kernel, [aembedding], weights,
                       tile_n=tile_n, input_buffering=input_buffering)
    offset = out[:, :FEAT_IN]
    mul = out[:, FEAT_IN:OUT_DIM]
    return offset, mul


# TODO(synk): get_bg_color (bg_head Linear(6,3)) is not exercised by forward();
# it would be one extra small matmul tile if needed.


# ----------------------------- references ---------------------------------------
def reference_forward_bf16(kp, gembedding, aembedding, features_dc, *,
                           app_per_gauss):
    """Pure-JAX reference using the SAME prepared (bf16 / folded / padded)
    params and the same bf16-in / f32-accumulate matmul precision."""
    if app_per_gauss and gembedding is not None:
        inp = jnp.concatenate((features_dc, gembedding, aembedding), axis=-1)
        w1 = jnp.concatenate((kp["w1a"], kp["w1b"], kp["w1c"]), axis=0)
    else:
        inp = aembedding
        w1 = kp["w1"]
    x = inp.astype(jnp.bfloat16)
    h1 = jnp.maximum(
        jnp.dot(x, w1, preferred_element_type=jnp.float32) + kp["b1"], 0.0
    ).astype(jnp.bfloat16)
    h2 = jnp.maximum(
        jnp.dot(h1, kp["w2"], preferred_element_type=jnp.float32) + kp["b2"], 0.0
    ).astype(jnp.bfloat16)
    out = jnp.dot(h2, kp["w3"], preferred_element_type=jnp.float32) + kp["b3"]
    return out[:, :FEAT_IN], out[:, FEAT_IN:OUT_DIM]


def reference_forward_f32(params, config, gembedding, aembedding, features_dc):
    w1, b1, w2, b2, w3, b3 = params
    if config.app_per_gauss and gembedding is not None:
        inp = jnp.concatenate((features_dc, gembedding, aembedding), axis=-1)
    else:
        inp = aembedding
    h = jnp.maximum(inp @ w1 + b1, 0.0)
    h = jnp.maximum(h @ w2 + b2, 0.0)
    out = (h @ w3 + b3) * SCALE
    return out[:, :FEAT_IN], out[:, FEAT_IN:]


# ----------------------------- main ---------------------------------------------
if __name__ == "__main__":
    cfg = Config()
    input_dim = (cfg.appearance_embedding_dim
                 + 6 * cfg.appearance_n_fourier_freqs + FEAT_IN)   # 32+24+3 = 59

    key = jax.random.PRNGKey(0)
    k_par, k_g, k_a, k_f, k_par2 = jax.random.split(key, 5)

    N = 300  # not a multiple of the tile -> exercises the masked edge block
    gembedding = jax.random.normal(
        k_g, (N, 6 * cfg.appearance_n_fourier_freqs), jnp.float32)
    aembedding = jax.random.normal(
        k_a, (N, cfg.appearance_embedding_dim), jnp.float32)
    features_dc = jax.random.normal(k_f, (N, FEAT_IN), jnp.float32)

    # --- fused (app_per_gauss=True) path ---
    params = init_params(k_par, input_dim)
    kp = prepare_kernel_params(params, cfg)        # one-time weight prep
    fwd = jax.jit(functools.partial(embedding_model_forward, app_per_gauss=True))

    offset, mul = fwd(kp, gembedding, aembedding, features_dc)
    offset = jax.block_until_ready(offset)
    mul = jax.block_until_ready(mul)
    assert offset.shape == (N, FEAT_IN) and mul.shape == (N, FEAT_IN)

    r_off, r_mul = reference_forward_bf16(
        kp, gembedding, aembedding, features_dc, app_per_gauss=True)
    assert jnp.allclose(offset, r_off, atol=1e-4, rtol=1e-2)
    assert jnp.allclose(mul, r_mul, atol=1e-4, rtol=1e-2)

    # loose sanity check vs the full-f32 math of the original module
    f_off, f_mul = reference_forward_f32(
        params, cfg, gembedding, aembedding, features_dc)
    assert jnp.allclose(offset, f_off, atol=5e-3, rtol=5e-2)
    assert jnp.allclose(mul, f_mul, atol=5e-3, rtol=5e-2)

    # --- single-input (app_per_gauss=False) path ---
    class Config2(Config):
        app_per_gauss = False

    cfg2 = Config2()
    params2 = init_params(k_par2, cfg.appearance_embedding_dim)
    kp2 = prepare_kernel_params(params2, cfg2)
    fwd2 = jax.jit(functools.partial(embedding_model_forward, app_per_gauss=False))

    off2, mul2 = fwd2(kp2, None, aembedding, features_dc)
    off2 = jax.block_until_ready(off2)
    mul2 = jax.block_until_ready(mul2)
    r_off2, r_mul2 = reference_forward_bf16(
        kp2, None, aembedding, features_dc, app_per_gauss=False)
    assert jnp.allclose(off2, r_off2, atol=1e-4, rtol=1e-2)
    assert jnp.allclose(mul2, r_mul2, atol=1e-4, rtol=1e-2)

    print("KERNEL_OK")
</pallas_src>

<mosaic_0001>
module attributes {stable_mosaic.version = 11 : i64} {
  func.func @_mlp_fused_kernel(%arg0: i32, %arg1: memref<304x3xf32, #tpu.memory_space<vmem>>, %arg2: memref<304x24xf32, #tpu.memory_space<vmem>>, %arg3: memref<304x32xf32, #tpu.memory_space<vmem>>, %arg4: memref<3x128xbf16, #tpu.memory_space<vmem>>, %arg5: memref<24x128xbf16, #tpu.memory_space<vmem>>, %arg6: memref<32x128xbf16, #tpu.memory_space<vmem>>, %arg7: memref<1x128xf32, #tpu.memory_space<vmem>>, %arg8: memref<128x128xbf16, #tpu.memory_space<vmem>>, %arg9: memref<1x128xf32, #tpu.memory_space<vmem>>, %arg10: memref<128x8xbf16, #tpu.memory_space<vmem>>, %arg11: memref<1x8xf32, #tpu.memory_space<vmem>>, %arg12: memref<304x8xf32, #tpu.memory_space<vmem>>) attributes {dimension_semantics = [#tpu.dimension_semantics<parallel>], iteration_bounds = array<i64: 1>, scalar_prefetch = 0 : i64, scratch_operands = 0 : i64, tpu.core_type = #tpu.core_type<tc>, window_params = [{transform_indices = @transform_0, window_bounds = array<i64: 304, 3>}, {transform_indices = @transform_1, window_bounds = array<i64: 304, 24>}, {transform_indices = @transform_2, window_bounds = array<i64: 304, 32>}, {pipeline_mode = #tpu.pipeline_mode<synchronous>, transform_indices = @transform_3, window_bounds = array<i64: 3, 128>}, {pipeline_mode = #tpu.pipeline_mode<synchronous>, transform_indices = @transform_4, window_bounds = array<i64: 24, 128>}, {pipeline_mode = #tpu.pipeline_mode<synchronous>, transform_indices = @transform_5, window_bounds = array<i64: 32, 128>}, {pipeline_mode = #tpu.pipeline_mode<synchronous>, transform_indices = @transform_6, window_bounds = array<i64: 1, 128>}, {pipeline_mode = #tpu.pipeline_mode<synchronous>, transform_indices = @transform_7, window_bounds = array<i64: 128, 128>}, {pipeline_mode = #tpu.pipeline_mode<synchronous>, transform_indices = @transform_8, window_bounds = array<i64: 1, 128>}, {pipeline_mode = #tpu.pipeline_mode<synchronous>, transform_indices = @transform_9, window_bounds = array<i64: 128, 8>}, {pipeline_mode = #tpu.pipeline_mode<synchronous>, transform_indices = @transform_10, window_bounds = array<i64: 1, 8>}, {transform_indices = @transform_11, window_bounds = array<i64: 304, 8>}]} {
    %c0 = arith.constant 0 : index
    %c0_0 = arith.constant 0 : index
    %0 = vector.load %arg1[%c0, %c0_0] : memref<304x3xf32, #tpu.memory_space<vmem>>, vector<304x3xf32>
    %1 = arith.truncf %0 : vector<304x3xf32> to vector<304x3xbf16>
    %c0_1 = arith.constant 0 : index
    %c0_2 = arith.constant 0 : index
    %2 = vector.load %arg2[%c0_1, %c0_2] : memref<304x24xf32, #tpu.memory_space<vmem>>, vector<304x24xf32>
    %3 = arith.truncf %2 : vector<304x24xf32> to vector<304x24xbf16>
    %c0_3 = arith.constant 0 : index
    %c0_4 = arith.constant 0 : index
    %4 = vector.load %arg3[%c0_3, %c0_4] : memref<304x32xf32, #tpu.memory_space<vmem>>, vector<304x32xf32>
    %5 = arith.truncf %4 : vector<304x32xf32> to vector<304x32xbf16>
    %c0_5 = arith.constant 0 : index
    %c0_6 = arith.constant 0 : index
    %6 = vector.load %arg4[%c0_5, %c0_6] : memref<3x128xbf16, #tpu.memory_space<vmem>>, vector<3x128xbf16>
    %cst = arith.constant dense<0.000000e+00> : vector<304x128xf32>
    %7 = tpu.matmul %1, %6, %cst {dimension_numbers = #tpu.dot_dimension_numbers<[1], [0], [0], [1], [0, 0, 1, 1], [], []>} : vector<304x3xbf16>, vector<3x128xbf16>, vector<304x128xf32> -> vector<304x128xf32>
    %c0_7 = arith.constant 0 : index
    %c0_8 = arith.constant 0 : index
    %8 = vector.load %arg5[%c0_7, %c0_8] : memref<24x128xbf16, #tpu.memory_space<vmem>>, vector<24x128xbf16>
    %cst_9 = arith.constant dense<0.000000e+00> : vector<304x128xf32>
    %9 = tpu.matmul %3, %8, %cst_9 {dimension_numbers = #tpu.dot_dimension_numbers<[1], [0], [0], [1], [0, 0, 1, 1], [], []>} : vector<304x24xbf16>, vector<24x128xbf16>, vector<304x128xf32> -> vector<304x128xf32>
    %10 = arith.addf %7, %9 : vector<304x128xf32>
    %c0_10 = arith.constant 0 : index
    %c0_11 = arith.constant 0 : index
    %11 = vector.load %arg6[%c0_10, %c0_11] : memref<32x128xbf16, #tpu.memory_space<vmem>>, vector<32x128xbf16>
    %cst_12 = arith.constant dense<0.000000e+00> : vector<304x128xf32>
    %12 = tpu.matmul %5, %11, %cst_12 {dimension_numbers = #tpu.dot_dimension_numbers<[1], [0], [0], [1], [0, 0, 1, 1], [], []>} : vector<304x32xbf16>, vector<32x128xbf16>, vector<304x128xf32> -> vector<304x128xf32>
    %13 = arith.addf %10, %12 : vector<304x128xf32>
    %c0_13 = arith.constant 0 : index
    %c0_14 = arith.constant 0 : index
    %14 = vector.load %arg7[%c0_13, %c0_14] : memref<1x128xf32, #tpu.memory_space<vmem>>, vector<1x128xf32>
    %c0_15 = arith.constant 0 : index
    %c0_16 = arith.constant 0 : index
    %15 = vector.load %arg8[%c0_15, %c0_16] : memref<128x128xbf16, #tpu.memory_space<vmem>>, vector<128x128xbf16>
    %c0_17 = arith.constant 0 : index
    %c0_18 = arith.constant 0 : index
    %16 = vector.load %arg9[%c0_17, %c0_18] : memref<1x128xf32, #tpu.memory_space<vmem>>, vector<1x128xf32>
    %c0_19 = arith.constant 0 : index
    %c0_20 = arith.constant 0 : index
    %17 = vector.load %arg10[%c0_19, %c0_20] : memref<128x8xbf16, #tpu.memory_space<vmem>>, vector<128x8xbf16>
    %c0_21 = arith.constant 0 : index
    %c0_22 = arith.constant 0 : index
    %18 = vector.load %arg11[%c0_21, %c0_22] : memref<1x8xf32, #tpu.memory_space<vmem>>, vector<1x8xf32>
    %19 = vector.broadcast %14 : vector<1x128xf32> to vector<304x128xf32>
    %20 = arith.addf %13, %19 : vector<304x128xf32>
    %cst_23 = arith.constant 0.000000e+00 : f32
    %21 = vector.broadcast %cst_23 : f32 to vector<304x128xf32>
    %22 = arith.maximumf %20, %21 : vector<304x128xf32>
    %23 = arith.truncf %22 : vector<304x128xf32> to vector<304x128xbf16>
    %cst_24 = arith.constant dense<0.000000e+00> : vector<304x128xf32>
    %24 = tpu.matmul %23, %15, %cst_24 {dimension_numbers = #tpu.dot_dimension_numbers<[1], [0], [0], [1], [0, 0, 1, 1], [], []>} : vector<304x128xbf16>, vector<128x128xbf16>, vector<304x128xf32> -> vector<304x128xf32>
    %25 = vector.broadcast %16 : vector<1x128xf32> to vector<304x128xf32>
    %26 = arith.addf %24, %25 : vector<304x128xf32>
    %cst_25 = arith.constant 0.000000e+00 : f32
    %27 = vector.broadcast %cst_25 : f32 to vector<304x128xf32>
    %28 = arith.maximumf %26, %27 : vector<304x128xf32>
    %29 = arith.truncf %28 : vector<304x128xf32> to vector<304x128xbf16>
    %cst_26 = arith.constant dense<0.000000e+00> : vector<304x8xf32>
    %30 = tpu.matmul %29, %17, %cst_26 {dimension_numbers = #tpu.dot_dimension_numbers<[1], [0], [0], [1], [0, 0, 1, 1], [], []>} : vector<304x128xbf16>, vector<128x8xbf16>, vector<304x8xf32> -> vector<304x8xf32>
    %31 = vector.broadcast %18 : vector<1x8xf32> to vector<304x8xf32>
    %32 = arith.addf %30, %31 : vector<304x8xf32>
    %c0_27 = arith.constant 0 : index
    %c0_28 = arith.constant 0 : index
    %33 = vector.load %arg12[%c0_27, %c0_28] : memref<304x8xf32, #tpu.memory_space<vmem>>, vector<304x8xf32>
    tpu.vector_store %arg12[%c0_27, %c0_28], %32 {strides = array<i32>} : memref<304x8xf32, #tpu.memory_space<vmem>>, vector<304x8xf32>,
    return
  }
  func.func @transform_0(%arg0: i32) -> (i32, i32) {
    %c0_i32 = arith.constant 0 : i32
    %c0_i32_0 = arith.constant 0 : i32
    return %arg0, %c0_i32 : i32, i32
  }
  func.func @transform_1(%arg0: i32) -> (i32, i32) {
    %c0_i32 = arith.constant 0 : i32
    %c0_i32_0 = arith.constant 0 : i32
    return %arg0, %c0_i32 : i32, i32
  }
  func.func @transform_2(%arg0: i32) -> (i32, i32) {
    %c0_i32 = arith.constant 0 : i32
    %c0_i32_0 = arith.constant 0 : i32
    return %arg0, %c0_i32 : i32, i32
  }
  func.func @transform_3(%arg0: i32) -> (i32, i32) {
    %c0_i32 = arith.constant 0 : i32
    %c0_i32_0 = arith.constant 0 : i32
    %c0_i32_1 = arith.constant 0 : i32
    return %c0_i32, %c0_i32_0 : i32, i32
  }
  func.func @transform_4(%arg0: i32) -> (i32, i32) {
    %c0_i32 = arith.constant 0 : i32
    %c0_i32_0 = arith.constant 0 : i32
    %c0_i32_1 = arith.constant 0 : i32
    return %c0_i32, %c0_i32_0 : i32, i32
  }
  func.func @transform_5(%arg0: i32) -> (i32, i32) {
    %c0_i32 = arith.constant 0 : i32
    %c0_i32_0 = arith.constant 0 : i32
    %c0_i32_1 = arith.constant 0 : i32
    return %c0_i32, %c0_i32_0 : i32, i32
  }
  func.func @transform_6(%arg0: i32) -> (i32, i32) {
    %c0_i32 = arith.constant 0 : i32
    %c0_i32_0 = arith.constant 0 : i32
    %c0_i32_1 = arith.constant 0 : i32
    return %c0_i32, %c0_i32_0 : i32, i32
  }
  func.func @transform_7(%arg0: i32) -> (i32, i32) {
    %c0_i32 = arith.constant 0 : i32
    %c0_i32_0 = arith.constant 0 : i32
    %c0_i32_1 = arith.constant 0 : i32
    return %c0_i32, %c0_i32_0 : i32, i32
  }
  func.func @transform_8(%arg0: i32) -> (i32, i32) {
    %c0_i32 = arith.constant 0 : i32
    %c0_i32_0 = arith.constant 0 : i32
    %c0_i32_1 = arith.constant 0 : i32
    return %c0_i32, %c0_i32_0 : i32, i32
  }
  func.func @transform_9(%arg0: i32) -> (i32, i32) {
    %c0_i32 = arith.constant 0 : i32
    %c0_i32_0 = arith.constant 0 : i32
    %c0_i32_1 = arith.constant 0 : i32
    return %c0_i32, %c0_i32_0 : i32, i32
  }
  func.func @transform_10(%arg0: i32) -> (i32, i32) {
    %c0_i32 = arith.constant 0 : i32
    %c0_i32_0 = arith.constant 0 : i32
    %c0_i32_1 = arith.constant 0 : i32
    return %c0_i32, %c0_i32_0 : i32, i32
  }
  func.func @transform_11(%arg0: i32) -> (i32, i32) {
    %c0_i32 = arith.constant 0 : i32
    %c0_i32_0 = arith.constant 0 : i32
    return %arg0, %c0_i32 : i32, i32
  }
}

</mosaic_0001>

<llo_original>
// kernel: embedding_model_forward.1
$region0: #{embedding_model_forward.1}
  #allocation0 [shape = 'u32[]', space=smem, size = 0x4, offset = 0x4, fixed_abs, tag = 'smem constant byte address 0x4 - core index']
  #allocation1 [shape = 'u32[144,128]{1,0:T(1,128)}', space=vmem, size = 0x12000, scoped, tag = 'internal scratch']
  %s0 = inlined_call_operand.vmem [shape: f32[300,3], index: 0, kind: input, shape index: {}]
  %s1 = inlined_call_operand.vmem [shape: f32[300,24], index: 1, kind: input, shape index: {}]
  %s2 = inlined_call_operand.vmem [shape: f32[300,32], index: 2, kind: input, shape index: {}]
  %s3 = inlined_call_operand.vmem [shape: bf16[3,128], index: 3, kind: input, shape index: {}]
  %s4 = inlined_call_operand.vmem [shape: bf16[24,128], index: 4, kind: input, shape index: {}]
  %s5 = inlined_call_operand.vmem [shape: bf16[32,128], index: 5, kind: input, shape index: {}]
  %s6 = inlined_call_operand.vmem [shape: f32[1,128], index: 6, kind: input, shape index: {}]
  %s7 = inlined_call_operand.vmem [shape: bf16[128,128], index: 7, kind: input, shape index: {}]
  %s8 = inlined_call_operand.vmem [shape: f32[1,128], index: 8, kind: input, shape index: {}]
  %s9 = inlined_call_operand.vmem [shape: bf16[128,8], index: 9, kind: input, shape index: {}]
  %s10 = inlined_call_operand.vmem [shape: f32[1,8], index: 10, kind: input, shape index: {}]
  %s11 = inlined_call_operand.vmem [shape: f32[300,8], index: 11, kind: output, shape index: {}]
  %s12 = sld [smem:[#allocation0]]
  $region54: #{embedding_model_forward.1} parent=0
    _
  %s14 = ssub.s32 1, %s12
  %s15 = scalar_select 0, %s14, %s12
  // Predicated region
  $region2: #{embedding_model_forward.1} parent=0 // pred_check
    _
  $region3: #{embedding_model_forward.1} parent=0 // pred_check_branch
    %17 = sbr.rel (0) target = $region5
  $region4: #{embedding_model_forward.1} parent=0 // pred_region
    _
  $region5: #{embedding_model_forward.1} parent=0 // pred_fallthru
    _
  // Predicated region
  $region6: #{embedding_model_forward.1} parent=0 // pred_check
    _
  $region7: #{embedding_model_forward.1} parent=0 // pred_check_branch
    %19 = sbr.rel (0) target = $region9
  $region8: #{embedding_model_forward.1} parent=0 // pred_region
    _
  $region9: #{embedding_model_forward.1} parent=0 // pred_fallthru
    _
  // Predicated region
  $region10: #{embedding_model_forward.1} parent=0 // pred_check
    _
  $region11: #{embedding_model_forward.1} parent=0 // pred_check_branch
    %21 = sbr.rel (0) target = $region13
  $region12: #{embedding_model_forward.1} parent=0 // pred_region
    _
  $region13: #{embedding_model_forward.1} parent=0 // pred_fallthru
    _
  // Predicated region
  $region14: #{embedding_model_forward.1} parent=0 // pred_check
    _
  $region15: #{embedding_model_forward.1} parent=0 // pred_check_branch
    %23 = sbr.rel (0) target = $region17
  $region16: #{embedding_model_forward.1} parent=0 // pred_region
    _
  $region17: #{embedding_model_forward.1} parent=0 // pred_fallthru
    _
  // Predicated region
  $region18: #{embedding_model_forward.1} parent=0 // pred_check
    _
  $region19: #{embedding_model_forward.1} parent=0 // pred_check_branch
    %25 = sbr.rel (0) target = $region21
  $region20: #{embedding_model_forward.1} parent=0 // pred_region
    _
  $region21: #{embedding_model_forward.1} parent=0 // pred_fallthru
    _
  // Predicated region
  $region22: #{embedding_model_forward.1} parent=0 // pred_check
    _
  $region23: #{embedding_model_forward.1} parent=0 // pred_check_branch
    %27 = sbr.rel (0) target = $region25
  $region24: #{embedding_model_forward.1} parent=0 // pred_region
    _
  $region25: #{embedding_model_forward.1} parent=0 // pred_fallthru
    _
  // Predicated region
  $region26: #{embedding_model_forward.1} parent=0 // pred_check
    _
  $region27: #{embedding_model_forward.1} parent=0 // pred_check_branch
    %29 = sbr.rel (0) target = $region29
  $region28: #{embedding_model_forward.1} parent=0 // pred_region
    _
  $region29: #{embedding_model_forward.1} parent=0 // pred_fallthru
    _
  // Predicated region
  $region30: #{embedding_model_forward.1} parent=0 // pred_check
    _
  $region31: #{embedding_model_forward.1} parent=0 // pred_check_branch
    %31 = sbr.rel (0) target = $region33
  $region32: #{embedding_model_forward.1} parent=0 // pred_region
    _
  $region33: #{embedding_model_forward.1} parent=0 // pred_fallthru
    _
  // Predicated region
  $region34: #{embedding_model_forward.1} parent=0 // pred_check
    _
  $region35: #{embedding_model_forward.1} parent=0 // pred_check_branch
    %33 = sbr.rel (0) target = $region37
  $region36: #{embedding_model_forward.1} parent=0 // pred_region
    _
  $region37: #{embedding_model_forward.1} parent=0 // pred_fallthru
    _
  // Predicated region
  $region38: #{embedding_model_forward.1} parent=0 // pred_check
    _
  $region39: #{embedding_model_forward.1} parent=0 // pred_check_branch
    %35 = sbr.rel (0) target = $region41
  $region40: #{embedding_model_forward.1} parent=0 // pred_region
    _
  $region41: #{embedding_model_forward.1} parent=0 // pred_fallthru
    _
  // Predicated region
  $region42: #{embedding_model_forward.1} parent=0 // pred_check
    _
  $region43: #{embedding_model_forward.1} parent=0 // pred_check_branch
    %37 = sbr.rel (0) target = $region45
  $region44: #{embedding_model_forward.1} parent=0 // pred_region
    _
  $region45: #{embedding_model_forward.1} parent=0 // pred_fallthru
    _
  %v39 = vld [vmem:[%s0] sm:$0xff]
  %v40 = vld [vmem:[%s0 + $0x8] sm:$0xff]
  %v41 = vld [vmem:[%s0 + $0x10] sm:$0xff]
  %v42 = vld [vmem:[%s0 + $0x18] sm:$0xff]
  %v43 = vld [vmem:[%s0 + $0x20] sm:$0xff]
  %v44 = vld [vmem:[%s0 + $0x28] sm:$0xff]
  %v45 = vld [vmem:[%s0 + $0x30] sm:$0xff]
  %v46 = vld [vmem:[%s0 + $0x38] sm:$0xff]
  %v47 = vld [vmem:[%s0 + $0x40] sm:$0xff]
  %v48 = vld [vmem:[%s0 + $0x48] sm:$0xff]
  %v49 = vld [vmem:[%s0 + $0x50] sm:$0xff]
  %v50 = vld [vmem:[%s0 + $0x58] sm:$0xff]
  %v51 = vld [vmem:[%s0 + $0x60] sm:$0xff]
  %v52 = vld [vmem:[%s0 + $0x68] sm:$0xff]
  %v53 = vld [vmem:[%s0 + $0x70] sm:$0xff]
  %v54 = vld [vmem:[%s0 + $0x78] sm:$0xff]
  %v55 = vld [vmem:[%s0 + $0x80] sm:$0xff]
  %v56 = vld [vmem:[%s0 + $0x88] sm:$0xff]
  %v57 = vld [vmem:[%s0 + $0x90] sm:$0xff]
  %v58 = vld [vmem:[%s0 + $0x98] sm:$0xff]
  %v59 = vld [vmem:[%s0 + $0xa0] sm:$0xff]
  %v60 = vld [vmem:[%s0 + $0xa8] sm:$0xff]
  %v61 = vld [vmem:[%s0 + $0xb0] sm:$0xff]
  %v62 = vld [vmem:[%s0 + $0xb8] sm:$0xff]
  %v63 = vld [vmem:[%s0 + $0xc0] sm:$0xff]
  %v64 = vld [vmem:[%s0 + $0xc8] sm:$0xff]
  %v65 = vld [vmem:[%s0 + $0xd0] sm:$0xff]
  %v66 = vld [vmem:[%s0 + $0xd8] sm:$0xff]
  %v67 = vld [vmem:[%s0 + $0xe0] sm:$0xff]
  %v68 = vld [vmem:[%s0 + $0xe8] sm:$0xff]
  %v69 = vld [vmem:[%s0 + $0xf0] sm:$0xff]
  %v70 = vld [vmem:[%s0 + $0xf8] sm:$0xff]
  %v71 = vld [vmem:[%s0 + $0x100] sm:$0xff]
  %v72 = vld [vmem:[%s0 + $0x108] sm:$0xff]
  %v73 = vld [vmem:[%s0 + $0x110] sm:$0xff]
  %v74 = vld [vmem:[%s0 + $0x118] sm:$0xff]
  %v75 = vld [vmem:[%s0 + $0x120] sm:$0xff]
  %v76 = vld [vmem:[%s0 + $0x128] sm:$0xff]
  %v77 = vpack.c.bf16 %v40, %v39
  %v78 = vpack.c.bf16 %v42, %v41
  %v79 = vpack.c.bf16 %v44, %v43
  %v80 = vpack.c.bf16 %v46, %v45
  %v81 = vpack.c.bf16 %v48, %v47
  %v82 = vpack.c.bf16 %v50, %v49
  %v83 = vpack.c.bf16 %v52, %v51
  %v84 = vpack.c.bf16 %v54, %v53
  %v85 = vpack.c.bf16 %v56, %v55
  %v86 = vpack.c.bf16 %v58, %v57
  %v87 = vpack.c.bf16 %v60, %v59
  %v88 = vpack.c.bf16 %v62, %v61
  %v89 = vpack.c.bf16 %v64, %v63
  %v90 = vpack.c.bf16 %v66, %v65
  %v91 = vpack.c.bf16 %v68, %v67
  %v92 = vpack.c.bf16 %v70, %v69
  %v93 = vpack.c.bf16 %v72, %v71
  %v94 = vpack.c.bf16 %v74, %v73
  %v95 = vpack.c.bf16 %v76, %v75
  %v96 = vld [vmem:[%s1] sm:$0xff]
  %v97 = vld [vmem:[%s1 + $0x8] sm:$0xff]
  %v98 = vld [vmem:[%s1 + $0x10] sm:$0xff]
  %v99 = vld [vmem:[%s1 + $0x18] sm:$0xff]
  %v100 = vld [vmem:[%s1 + $0x20] sm:$0xff]
  %v101 = vld [vmem:[%s1 + $0x28] sm:$0xff]
  %v102 = vld [vmem:[%s1 + $0x30] sm:$0xff]
  %v103 = vld [vmem:[%s1 + $0x38] sm:$0xff]
  %v104 = vld [vmem:[%s1 + $0x40] sm:$0xff]
  %v105 = vld [vmem:[%s1 + $0x48] sm:$0xff]
  %v106 = vld [vmem:[%s1 + $0x50] sm:$0xff]
  %v107 = vld [vmem:[%s1 + $0x58] sm:$0xff]
  %v108 = vld [vmem:[%s1 + $0x60] sm:$0xff]
  %v109 = vld [vmem:[%s1 + $0x68] sm:$0xff]
  %v110 = vld [vmem:[%s1 + $0x70] sm:$0xff]
  %v111 = vld [vmem:[%s1 + $0x78] sm:$0xff]
  %v112 = vld [vmem:[%s1 + $0x80] sm:$0xff]
  %v113 = vld [vmem:[%s1 + $0x88] sm:$0xff]
  %v114 = vld [vmem:[%s1 + $0x90] sm:$0xff]
  %v115 = vld [vmem:[%s1 + $0x98] sm:$0xff]
  %v116 = vld [vmem:[%s1 + $0xa0] sm:$0xff]
  %v117 = vld [vmem:[%s1 + $0xa8] sm:$0xff]
  %v118 = vld [vmem:[%s1 + $0xb0] sm:$0xff]
  %v119 = vld [vmem:[%s1 + $0xb8] sm:$0xff]
  %v120 = vld [vmem:[%s1 + $0xc0] sm:$0xff]
  %v121 = vld [vmem:[%s1 + $0xc8] sm:$0xff]
  %v122 = vld [vmem:[%s1 + $0xd0] sm:$0xff]
  %v123 = vld [vmem:[%s1 + $0xd8] sm:$0xff]
  %v124 = vld [vmem:[%s1 + $0xe0] sm:$0xff]
  %v125 = vld [vmem:[%s1 + $0xe8] sm:$0xff]
  %v126 = vld [vmem:[%s1 + $0xf0] sm:$0xff]
  %v127 = vld [vmem:[%s1 + $0xf8] sm:$0xff]
  %v128 = vld [vmem:[%s1 + $0x100] sm:$0xff]
  %v129 = vld [vmem:[%s1 + $0x108] sm:$0xff]
  %v130 = vld [vmem:[%s1 + $0x110] sm:$0xff]
  %v131 = vld [vmem:[%s1 + $0x118] sm:$0xff]
  %v132 = vld [vmem:[%s1 + $0x120] sm:$0xff]
  %v133 = vld [vmem:[%s1 + $0x128] sm:$0xff]
  %v134 = vpack.c.bf16 %v97, %v96
  %v135 = vpack.c.bf16 %v99, %v98
  %v136 = vpack.c.bf16 %v101, %v100
  %v137 = vpack.c.bf16 %v103, %v102
  %v138 = vpack.c.bf16 %v105, %v104
  %v139 = vpack.c.bf16 %v107, %v106
  %v140 = vpack.c.bf16 %v109, %v108
  %v141 = vpack.c.bf16 %v111, %v110
  %v142 = vpack.c.bf16 %v113, %v112
  %v143 = vpack.c.bf16 %v115, %v114
  %v144 = vpack.c.bf16 %v117, %v116
  %v145 = vpack.c.bf16 %v119, %v118
  %v146 = vpack.c.bf16 %v121, %v120
  %v147 = vpack.c.bf16 %v123, %v122
  %v148 = vpack.c.bf16 %v125, %v124
  %v149 = vpack.c.bf16 %v127, %v126
  %v150 = vpack.c.bf16 %v129, %v128
  %v151 = vpack.c.bf16 %v131, %v130
  %v152 = vpack.c.bf16 %v133, %v132
  %v153 = vld [vmem:[%s2] sm:$0xff]
  %v154 = vld [vmem:[%s2 + $0x8] sm:$0xff]
  %v155 = vld [vmem:[%s2 + $0x10] sm:$0xff]
  %v156 = vld [vmem:[%s2 + $0x18] sm:$0xff]
  %v157 = vld [vmem:[%s2 + $0x20] sm:$0xff]
  %v158 = vld [vmem:[%s2 + $0x28] sm:$0xff]
  %v159 = vld [vmem:[%s2 + $0x30] sm:$0xff]
  %v160 = vld [vmem:[%s2 + $0x38] sm:$0xff]
  %v161 = vld [vmem:[%s2 + $0x40] sm:$0xff]
  %v162 = vld [vmem:[%s2 + $0x48] sm:$0xff]
  %v163 = vld [vmem:[%s2 + $0x50] sm:$0xff]
  %v164 = vld [vmem:[%s2 + $0x58] sm:$0xff]
  %v165 = vld [vmem:[%s2 + $0x60] sm:$0xff]
  %v166 = vld [vmem:[%s2 + $0x68] sm:$0xff]
  %v167 = vld [vmem:[%s2 + $0x70] sm:$0xff]
  %v168 = vld [vmem:[%s2 + $0x78] sm:$0xff]
  %v169 = vld [vmem:[%s2 + $0x80] sm:$0xff]
  %v170 = vld [vmem:[%s2 + $0x88] sm:$0xff]
  %v171 = vld [vmem:[%s2 + $0x90] sm:$0xff]
  %v172 = vld [vmem:[%s2 + $0x98] sm:$0xff]
  %v173 = vld [vmem:[%s2 + $0xa0] sm:$0xff]
  %v174 = vld [vmem:[%s2 + $0xa8] sm:$0xff]
  %v175 = vld [vmem:[%s2 + $0xb0] sm:$0xff]
  %v176 = vld [vmem:[%s2 + $0xb8] sm:$0xff]
  %v177 = vld [vmem:[%s2 + $0xc0] sm:$0xff]
  %v178 = vld [vmem:[%s2 + $0xc8] sm:$0xff]
  %v179 = vld [vmem:[%s2 + $0xd0] sm:$0xff]
  %v180 = vld [vmem:[%s2 + $0xd8] sm:$0xff]
  %v181 = vld [vmem:[%s2 + $0xe0] sm:$0xff]
  %v182 = vld [vmem:[%s2 + $0xe8] sm:$0xff]
  %v183 = vld [vmem:[%s2 + $0xf0] sm:$0xff]
  %v184 = vld [vmem:[%s2 + $0xf8] sm:$0xff]
  %v185 = vld [vmem:[%s2 + $0x100] sm:$0xff]
  %v186 = vld [vmem:[%s2 + $0x108] sm:$0xff]
  %v187 = vld [vmem:[%s2 + $0x110] sm:$0xff]
  %v188 = vld [vmem:[%s2 + $0x118] sm:$0xff]
  %v189 = vld [vmem:[%s2 + $0x120] sm:$0xff]
  %v190 = vld [vmem:[%s2 + $0x128] sm:$0xff]
  %v191 = vpack.c.bf16 %v154, %v153
  %v192 = vpack.c.bf16 %v156, %v155
  %v193 = vpack.c.bf16 %v158, %v157
  %v194 = vpack.c.bf16 %v160, %v159
  %v195 = vpack.c.bf16 %v162, %v161
  %v196 = vpack.c.bf16 %v164, %v163
  %v197 = vpack.c.bf16 %v166, %v165
  %v198 = vpack.c.bf16 %v168, %v167
  %v199 = vpack.c.bf16 %v170, %v169
  %v200 = vpack.c.bf16 %v172, %v171
  %v201 = vpack.c.bf16 %v174, %v173
  %v202 = vpack.c.bf16 %v176, %v175
  %v203 = vpack.c.bf16 %v178, %v177
  %v204 = vpack.c.bf16 %v180, %v179
  %v205 = vpack.c.bf16 %v182, %v181
  %v206 = vpack.c.bf16 %v184, %v183
  %v207 = vpack.c.bf16 %v186, %v185
  %v208 = vpack.c.bf16 %v188, %v187
  %v209 = vpack.c.bf16 %v190, %v189
  %v210 = vld [vmem:[%s3] sm:$0x3]
  %v211 = vld [vmem:[%s4] sm:$0xf]
  %v212 = vld [vmem:[%s4 + $0x4] sm:$0xf]
  %v213 = vld [vmem:[%s4 + $0x8] sm:$0xf]
  %v217 = vunpack.c.l.b16 %v211
  %v218 = vunpack.c.l.b16 %v212
  %v219 = vunpack.c.l.b16 %v213
  %v220 = vpack.c.b16 %v218, %v217
  %v221 = vpack.c.b16 %v219, %v219
  %vm223 = vcmask 195584
  %v225 = vsel %vm223, %v134, 0
  %v228 = vsel %vm223, %v135, 0
  %v231 = vsel %vm223, %v136, 0
  %v234 = vsel %vm223, %v137, 0
  %v237 = vsel %vm223, %v138, 0
  %v240 = vsel %vm223, %v139, 0
  %v243 = vsel %vm223, %v140, 0
  %v246 = vsel %vm223, %v141, 0
  %v249 = vsel %vm223, %v142, 0
  %v252 = vsel %vm223, %v143, 0
  %v255 = vsel %vm223, %v144, 0
  %v258 = vsel %vm223, %v145, 0
  %v261 = vsel %vm223, %v146, 0
  %v264 = vsel %vm223, %v147, 0
  %v267 = vsel %vm223, %v148, 0
  %v270 = vsel %vm223, %v149, 0
  %v273 = vsel %vm223, %v150, 0
  %v276 = vsel %vm223, %v151, 0
  %v279 = vsel %vm223, %v152, 0
  %vm281 = vcmask 1043456
  %v283 = vsel %vm281, %v221, 0
  %285 = vmatprep.subr.bf16.mxu0 0
  %286 = vmatpush1.bf16.msra.mxu0 0
  %287 = vmatprep.subr.bf16.mxu0 0
  %288 = vmatpush1.bf16.msra.mxu0 0
  %289 = vmatprep.subr.bf16.mxu0 0
  %290 = vmatpush1.bf16.msra.mxu0 0
  %291 = vmatprep.subr.bf16.mxu0 0
  %292 = vmatpush1.bf16.msra.mxu0 0
  %293 = vmatprep.subr.bf16.mxu0 0
  %294 = vmatpush1.bf16.msra.mxu0 0
  %295 = vmatprep.subr.bf16.mxu0 0
  %296 = vmatpush1.bf16.msra.mxu0 0
  %297 = vmatprep.subr.bf16.mxu0 0
  %298 = vmatpush1.bf16.msra.mxu0 %v283
  %299 = vmatprep.subr.bf16.mxu0 0
  %300 = vmatpush1.bf16.msra.mxu0 %v220
  %301 = vmatprep.subr.bf16.mxu0 0
  %302 = vmatpush2.bf16.msra.mxu0 0
  %303 = vmatprep.subr.bf16.mxu0 0
  %304 = vmatpush2.bf16.msra.mxu0 0
  %305 = vmatprep.subr.bf16.mxu0 0
  %306 = vmatpush2.bf16.msra.mxu0 0
  %307 = vmatprep.subr.bf16.mxu0 0
  %308 = vmatpush2.bf16.msra.mxu0 0
  %309 = vmatprep.subr.bf16.mxu0 0
  %310 = vmatpush2.bf16.msra.mxu0 0
  %311 = vmatprep.subr.bf16.mxu0 0
  %312 = vmatpush2.bf16.msra.mxu0 0
  %313 = vmatprep.subr.bf16.mxu0 0
  %314 = vmatpush2.bf16.msra.mxu0 0
  %315 = vmatprep.subr.bf16.mxu0 0
  %316 = vmatpush2.bf16.msra.mxu0 0
  %317 = vmatprep.mubr.bf16.mxu0 0
  %318 = vmatmul.mubr.bf16.gmra.mxu0 %v225
  %v319 = vpop.f32.mrf.mxu0
  %v320 = vadd.f32 0.0, %v319
  %v321 = vpop.f32.mrf.mxu0
  %v322 = vpop.f32.mrf.mxu0
  %v323 = vadd.f32 0.0, %v322
  %v324 = vpop.f32.mrf.mxu0
  %325 = vmatprep.mubr.bf16.mxu0 0
  %326 = vmatmul.mubr.bf16.gmra.mxu0 %v228
  %v327 = vpop.f32.mrf.mxu0
  %v328 = vadd.f32 0.0, %v327
  %v329 = vpop.f32.mrf.mxu0
  %v330 = vpop.f32.mrf.mxu0
  %v331 = vadd.f32 0.0, %v330
  %v332 = vpop.f32.mrf.mxu0
  %333 = vmatprep.mubr.bf16.mxu0 0
  %334 = vmatmul.mubr.bf16.gmra.mxu0 %v231
  %v335 = vpop.f32.mrf.mxu0
  %v336 = vadd.f32 0.0, %v335
  %v337 = vpop.f32.mrf.mxu0
  %v338 = vpop.f32.mrf.mxu0
  %v339 = vadd.f32 0.0, %v338
  %v340 = vpop.f32.mrf.mxu0
  %341 = vmatprep.mubr.bf16.mxu0 0
  %342 = vmatmul.mubr.bf16.gmra.mxu0 %v234
  %v343 = vpop.f32.mrf.mxu0
  %v344 = vadd.f32 0.0, %v343
  %v345 = vpop.f32.mrf.mxu0
  %v346 = vpop.f32.mrf.mxu0
  %v347 = vadd.f32 0.0, %v346
  %v348 = vpop.f32.mrf.mxu0
  %349 = vmatprep.mubr.bf16.mxu0 0
  %350 = vmatmul.mubr.bf16.gmra.mxu0 %v237
  %v351 = vpop.f32.mrf.mxu0
  %v352 = vadd.f32 0.0, %v351
  %v353 = vpop.f32.mrf.mxu0
  %v354 = vpop.f32.mrf.mxu0
  %v355 = vadd.f32 0.0, %v354
  %v356 = vpop.f32.mrf.mxu0
  %357 = vmatprep.mubr.bf16.mxu0 0
  %358 = vmatmul.mubr.bf16.gmra.mxu0 %v240
  %v359 = vpop.f32.mrf.mxu0
  %v360 = vadd.f32 0.0, %v359
  %v361 = vpop.f32.mrf.mxu0
  %v362 = vpop.f32.mrf.mxu0
  %v363 = vadd.f32 0.0, %v362
  %v364 = vpop.f32.mrf.mxu0
  %365 = vmatprep.mubr.bf16.mxu0 0
  %366 = vmatmul.mubr.bf16.gmra.mxu0 %v243
  %v367 = vpop.f32.mrf.mxu0
  %v368 = vadd.f32 0.0, %v367
  %v369 = vpop.f32.mrf.mxu0
  %v370 = vpop.f32.mrf.mxu0
  %v371 = vadd.f32 0.0, %v370
  %v372 = vpop.f32.mrf.mxu0
  %373 = vmatprep.mubr.bf16.mxu0 0
  %374 = vmatmul.mubr.bf16.gmra.mxu0 %v246
  %v375 = vpop.f32.mrf.mxu0
  %v376 = vadd.f32 0.0, %v375
  %v377 = vpop.f32.mrf.mxu0
  %v378 = vpop.f32.mrf.mxu0
  %v379 = vadd.f32 0.0, %v378
  %v380 = vpop.f32.mrf.mxu0
  %381 = vmatprep.mubr.bf16.mxu0 0
  %382 = vmatmul.mubr.bf16.gmra.mxu0 %v249
  %v383 = vpop.f32.mrf.mxu0
  %v384 = vadd.f32 0.0, %v383
  %v385 = vpop.f32.mrf.mxu0
  %v386 = vpop.f32.mrf.mxu0
  %v387 = vadd.f32 0.0, %v386
  %v388 = vpop.f32.mrf.mxu0
  %389 = vmatprep.mubr.bf16.mxu0 0
  %390 = vmatmul.mubr.bf16.gmra.mxu0 %v252
  %v391 = vpop.f32.mrf.mxu0
  %v392 = vadd.f32 0.0, %v391
  %v393 = vpop.f32.mrf.mxu0
  %v394 = vpop.f32.mrf.mxu0
  %v395 = vadd.f32 0.0, %v394
  %v396 = vpop.f32.mrf.mxu0
  %397 = vmatprep.mubr.bf16.mxu0 0
  %398 = vmatmul.mubr.bf16.gmra.mxu0 %v255
  %v399 = vpop.f32.mrf.mxu0
  %v400 = vadd.f32 0.0, %v399
  %v401 = vpop.f32.mrf.mxu0
  %v402 = vpop.f32.mrf.mxu0
  %v403 = vadd.f32 0.0, %v402
  %v404 = vpop.f32.mrf.mxu0
  %405 = vmatprep.mubr.bf16.mxu0 0
  %406 = vmatmul.mubr.bf16.gmra.mxu0 %v258
  %v407 = vpop.f32.mrf.mxu0
  %v408 = vadd.f32 0.0, %v407
  %v409 = vpop.f32.mrf.mxu0
  %v410 = vpop.f32.mrf.mxu0
  %v411 = vadd.f32 0.0, %v410
  %v412 = vpop.f32.mrf.mxu0
  %413 = vmatprep.mubr.bf16.mxu0 0
  %414 = vmatmul.mubr.bf16.gmra.mxu0 %v261
  %v415 = vpop.f32.mrf.mxu0
  %v416 = vadd.f32 0.0, %v415
  %v417 = vpop.f32.mrf.mxu0
  %v418 = vpop.f32.mrf.mxu0
  %v419 = vadd.f32 0.0, %v418
  %v420 = vpop.f32.mrf.mxu0
  %421 = vmatprep.mubr.bf16.mxu0 0
  %422 = vmatmul.mubr.bf16.gmra.mxu0 %v264
  %v423 = vpop.f32.mrf.mxu0
  %v424 = vadd.f32 0.0, %v423
  %v425 = vpop.f32.mrf.mxu0
  %v426 = vpop.f32.mrf.mxu0
  %v427 = vadd.f32 0.0, %v426
  %v428 = vpop.f32.mrf.mxu0
  %429 = vmatprep.mubr.bf16.mxu0 0
  %430 = vmatmul.mubr.bf16.gmra.mxu0 %v267
  %v431 = vpop.f32.mrf.mxu0
  %v432 = vadd.f32 0.0, %v431
  %v433 = vpop.f32.mrf.mxu0
  %v434 = vpop.f32.mrf.mxu0
  %v435 = vadd.f32 0.0, %v434
  %v436 = vpop.f32.mrf.mxu0
  %437 = vmatprep.mubr.bf16.mxu0 0
  %438 = vmatmul.mubr.bf16.gmra.mxu0 %v270
  %v439 = vpop.f32.mrf.mxu0
  %v440 = vadd.f32 0.0, %v439
  %v441 = vpop.f32.mrf.mxu0
  %v442 = vpop.f32.mrf.mxu0
  %v443 = vadd.f32 0.0, %v442
  %v444 = vpop.f32.mrf.mxu0
  %445 = vmatprep.mubr.bf16.mxu0 0
  %446 = vmatmul.mubr.bf16.gmra.mxu0 %v273
  %v447 = vpop.f32.mrf.mxu0
  %v448 = vadd.f32 0.0, %v447
  %v449 = vpop.f32.mrf.mxu0
  %v450 = vpop.f32.mrf.mxu0
  %v451 = vadd.f32 0.0, %v450
  %v452 = vpop.f32.mrf.mxu0
  %453 = vmatprep.mubr.bf16.mxu0 0
  %454 = vmatmul.mubr.bf16.gmra.mxu0 %v276
  %v455 = vpop.f32.mrf.mxu0
  %v456 = vadd.f32 0.0, %v455
  %v457 = vpop.f32.mrf.mxu0
  %v458 = vpop.f32.mrf.mxu0
  %v459 = vadd.f32 0.0, %v458
  %v460 = vpop.f32.mrf.mxu0
  %461 = vmatprep.mubr.bf16.mxu0 0
  %462 = vmatmul.mubr.bf16.gmra.mxu0 %v279
  %v463 = vpop.f32.mrf.mxu0
  %v464 = vadd.f32 0.0, %v463
  %v465 = vpop.f32.mrf.mxu0
  %v466 = vpop.f32.mrf.mxu0
  %v467 = vadd.f32 0.0, %v466
  %v468 = vpop.f32.mrf.mxu0
  %469 = vdwg.mxu0
  %vm470 = vcmask 23552
  %v472 = vsel %vm470, %v77, 0
  %v475 = vsel %vm470, %v78, 0
  %v478 = vsel %vm470, %v79, 0
  %v481 = vsel %vm470, %v80, 0
  %v484 = vsel %vm470, %v81, 0
  %v487 = vsel %vm470, %v82, 0
  %v490 = vsel %vm470, %v83, 0
  %v493 = vsel %vm470, %v84, 0
  %v496 = vsel %vm470, %v85, 0
  %v499 = vsel %vm470, %v86, 0
  %v502 = vsel %vm470, %v87, 0
  %v505 = vsel %vm470, %v88, 0
  %v508 = vsel %vm470, %v89, 0
  %v511 = vsel %vm470, %v90, 0
  %v514 = vsel %vm470, %v91, 0
  %v517 = vsel %vm470, %v92, 0
  %v520 = vsel %vm470, %v93, 0
  %v523 = vsel %vm470, %v94, 0
  %v526 = vsel %vm470, %v95, 0
  %vm528 = vcmask 1040384
  %vm529 = vcmask 1041408
  %v530 = vsel %vm528, 4294967295, 65535
  %v531 = vsel %vm529, %v530, 0
  %v533 = vand.u32 %v210, %v531
  %535 = vmatprep.subr.bf16.mxu0 0
  %536 = vmatpush1.bf16.msra.mxu0 0
  %537 = vmatprep.subr.bf16.mxu0 0
  %538 = vmatpush1.bf16.msra.mxu0 0
  %539 = vmatprep.subr.bf16.mxu0 0
  %540 = vmatpush1.bf16.msra.mxu0 0
  %541 = vmatprep.subr.bf16.mxu0 0
  %542 = vmatpush1.bf16.msra.mxu0 0
  %543 = vmatprep.subr.bf16.mxu0 0
  %544 = vmatpush1.bf16.msra.mxu0 0
  %545 = vmatprep.subr.bf16.mxu0 0
  %546 = vmatpush1.bf16.msra.mxu0 0
  %547 = vmatprep.subr.bf16.mxu0 0
  %548 = vmatpush1.bf16.msra.mxu0 0
  %549 = vmatprep.subr.bf16.mxu0 0
  %550 = vmatpush1.bf16.msra.mxu0 %v533
  %551 = vmatprep.subr.bf16.mxu0 0
  %552 = vmatpush2.bf16.msra.mxu0 0
  %553 = vmatprep.subr.bf16.mxu0 0
  %554 = vmatpush2.bf16.msra.mxu0 0
  %555 = vmatprep.subr.bf16.mxu0 0
  %556 = vmatpush2.bf16.msra.mxu0 0
  %557 = vmatprep.subr.bf16.mxu0 0
  %558 = vmatpush2.bf16.msra.mxu0 0
  %559 = vmatprep.subr.bf16.mxu0 0
  %560 = vmatpush2.bf16.msra.mxu0 0
  %561 = vmatprep.subr.bf16.mxu0 0
  %562 = vmatpush2.bf16.msra.mxu0 0
  %563 = vmatprep.subr.bf16.mxu0 0
  %564 = vmatpush2.bf16.msra.mxu0 0
  %565 = vmatprep.subr.bf16.mxu0 0
  %566 = vmatpush2.bf16.msra.mxu0 0
  %567 = vmatprep.mubr.bf16.mxu0 0
  %568 = vmatmul.mubr.bf16.gmra.mxu0 %v472
  %v569 = vpop.f32.mrf.mxu0
  %v570 = vadd.f32 %v320, %v569
  %v571 = vpop.f32.mrf.mxu0
  %v572 = vpop.f32.mrf.mxu0
  %v573 = vadd.f32 %v323, %v572
  %v574 = vpop.f32.mrf.mxu0
  %575 = vmatprep.mubr.bf16.mxu0 0
  %576 = vmatmul.mubr.bf16.gmra.mxu0 %v475
  %v577 = vpop.f32.mrf.mxu0
  %v578 = vadd.f32 %v328, %v577
  %v579 = vpop.f32.mrf.mxu0
  %v580 = vpop.f32.mrf.mxu0
  %v581 = vadd.f32 %v331, %v580
  %v582 = vpop.f32.mrf.mxu0
  %583 = vmatprep.mubr.bf16.mxu0 0
  %584 = vmatmul.mubr.bf16.gmra.mxu0 %v478
  %v585 = vpop.f32.mrf.mxu0
  %v586 = vadd.f32 %v336, %v585
  %v587 = vpop.f32.mrf.mxu0
  %v588 = vpop.f32.mrf.mxu0
  %v589 = vadd.f32 %v339, %v588
  %v590 = vpop.f32.mrf.mxu0
  %591 = vmatprep.mubr.bf16.mxu0 0
  %592 = vmatmul.mubr.bf16.gmra.mxu0 %v481
  %v593 = vpop.f32.mrf.mxu0
  %v594 = vadd.f32 %v344, %v593
  %v595 = vpop.f32.mrf.mxu0
  %v596 = vpop.f32.mrf.mxu0
  %v597 = vadd.f32 %v347, %v596
  %v598 = vpop.f32.mrf.mxu0
  %599 = vmatprep.mubr.bf16.mxu0 0
  %600 = vmatmul.mubr.bf16.gmra.mxu0 %v484
  %v601 = vpop.f32.mrf.mxu0
  %v602 = vadd.f32 %v352, %v601
  %v603 = vpop.f32.mrf.mxu0
  %v604 = vpop.f32.mrf.mxu0
  %v605 = vadd.f32 %v355, %v604
  %v606 = vpop.f32.mrf.mxu0
  %607 = vmatprep.mubr.bf16.mxu0 0
  %608 = vmatmul.mubr.bf16.gmra.mxu0 %v487
  %v609 = vpop.f32.mrf.mxu0
  %v610 = vadd.f32 %v360, %v609
  %v611 = vpop.f32.mrf.mxu0
  %v612 = vpop.f32.mrf.mxu0
  %v613 = vadd.f32 %v363, %v612
  %v614 = vpop.f32.mrf.mxu0
  %615 = vmatprep.mubr.bf16.mxu0 0
  %616 = vmatmul.mubr.bf16.gmra.mxu0 %v490
  %v617 = vpop.f32.mrf.mxu0
  %v618 = vadd.f32 %v368, %v617
  %v619 = vpop.f32.mrf.mxu0
  %v620 = vpop.f32.mrf.mxu0
  %v621 = vadd.f32 %v371, %v620
  %v622 = vpop.f32.mrf.mxu0
  %623 = vmatprep.mubr.bf16.mxu0 0
  %624 = vmatmul.mubr.bf16.gmra.mxu0 %v493
  %v625 = vpop.f32.mrf.mxu0
  %v626 = vadd.f32 %v376, %v625
  %v627 = vpop.f32.mrf.mxu0
  %v628 = vpop.f32.mrf.mxu0
  %v629 = vadd.f32 %v379, %v628
  %v630 = vpop.f32.mrf.mxu0
  %631 = vmatprep.mubr.bf16.mxu0 0
  %632 = vmatmul.mubr.bf16.gmra.mxu0 %v496
  %v633 = vpop.f32.mrf.mxu0
  %v634 = vadd.f32 %v384, %v633
  %v635 = vpop.f32.mrf.mxu0
  %v636 = vpop.f32.mrf.mxu0
  %v637 = vadd.f32 %v387, %v636
  %v638 = vpop.f32.mrf.mxu0
  %639 = vmatprep.mubr.bf16.mxu0 0
  %640 = vmatmul.mubr.bf16.gmra.mxu0 %v499
  %v641 = vpop.f32.mrf.mxu0
  %v642 = vadd.f32 %v392, %v641
  %v643 = vpop.f32.mrf.mxu0
  %v644 = vpop.f32.mrf.mxu0
  %v645 = vadd.f32 %v395, %v644
  %v646 = vpop.f32.mrf.mxu0
  %647 = vmatprep.mubr.bf16.mxu0 0
  %648 = vmatmul.mubr.bf16.gmra.mxu0 %v502
  %v649 = vpop.f32.mrf.mxu0
  %v650 = vadd.f32 %v400, %v649
  %v651 = vpop.f32.mrf.mxu0
  %v652 = vpop.f32.mrf.mxu0
  %v653 = vadd.f32 %v403, %v652
  %v654 = vpop.f32.mrf.mxu0
  %655 = vmatprep.mubr.bf16.mxu0 0
  %656 = vmatmul.mubr.bf16.gmra.mxu0 %v505
  %v657 = vpop.f32.mrf.mxu0
  %v658 = vadd.f32 %v408, %v657
  %v659 = vpop.f32.mrf.mxu0
  %v660 = vpop.f32.mrf.mxu0
  %v661 = vadd.f32 %v411, %v660
  %v662 = vpop.f32.mrf.mxu0
  %663 = vmatprep.mubr.bf16.mxu0 0
  %664 = vmatmul.mubr.bf16.gmra.mxu0 %v508
  %v665 = vpop.f32.mrf.mxu0
  %v666 = vadd.f32 %v416, %v665
  %v667 = vpop.f32.mrf.mxu0
  %v668 = vpop.f32.mrf.mxu0
  %v669 = vadd.f32 %v419, %v668
  %v670 = vpop.f32.mrf.mxu0
  %671 = vmatprep.mubr.bf16.mxu0 0
  %672 = vmatmul.mubr.bf16.gmra.mxu0 %v511
  %v673 = vpop.f32.mrf.mxu0
  %v674 = vadd.f32 %v424, %v673
  %v675 = vpop.f32.mrf.mxu0
  %v676 = vpop.f32.mrf.mxu0
  %v677 = vadd.f32 %v427, %v676
  %v678 = vpop.f32.mrf.mxu0
  %679 = vmatprep.mubr.bf16.mxu0 0
  %680 = vmatmul.mubr.bf16.gmra.mxu0 %v514
  %v681 = vpop.f32.mrf.mxu0
  %v682 = vadd.f32 %v432, %v681
  %v683 = vpop.f32.mrf.mxu0
  %v684 = vpop.f32.mrf.mxu0
  %v685 = vadd.f32 %v435, %v684
  %v686 = vpop.f32.mrf.mxu0
  %687 = vmatprep.mubr.bf16.mxu0 0
  %688 = vmatmul.mubr.bf16.gmra.mxu0 %v517
  %v689 = vpop.f32.mrf.mxu0
  %v690 = vadd.f32 %v440, %v689
  %v691 = vpop.f32.mrf.mxu0
  %v692 = vpop.f32.mrf.mxu0
  %v693 = vadd.f32 %v443, %v692
  %v694 = vpop.f32.mrf.mxu0
  %695 = vmatprep.mubr.bf16.mxu0 0
  %696 = vmatmul.mubr.bf16.gmra.mxu0 %v520
  %v697 = vpop.f32.mrf.mxu0
  %v698 = vadd.f32 %v448, %v697
  %v699 = vpop.f32.mrf.mxu0
  %v700 = vpop.f32.mrf.mxu0
  %v701 = vadd.f32 %v451, %v700
  %v702 = vpop.f32.mrf.mxu0
  %703 = vmatprep.mubr.bf16.mxu0 0
  %704 = vmatmul.mubr.bf16.gmra.mxu0 %v523
  %v705 = vpop.f32.mrf.mxu0
  %v706 = vadd.f32 %v456, %v705
  %v707 = vpop.f32.mrf.mxu0
  %v708 = vpop.f32.mrf.mxu0
  %v709 = vadd.f32 %v459, %v708
  %v710 = vpop.f32.mrf.mxu0
  %711 = vmatprep.mubr.bf16.mxu0 0
  %712 = vmatmul.mubr.bf16.gmra.mxu0 %v526
  %v713 = vpop.f32.mrf.mxu0
  %v714 = vadd.f32 %v464, %v713
  %v715 = vpop.f32.mrf.mxu0
  %v716 = vpop.f32.mrf.mxu0
  %v717 = vadd.f32 %v467, %v716
  %v718 = vpop.f32.mrf.mxu0
  %719 = vdwg.mxu0
  %v720 = vld [vmem:[%s5] sm:$0xf]
  %v721 = vld [vmem:[%s5 + $0x4] sm:$0xf]
  %v722 = vld [vmem:[%s5 + $0x8] sm:$0xf]
  %v723 = vld [vmem:[%s5 + $0xc] sm:$0xf]
  %v728 = vunpack.c.l.b16 %v720
  %v729 = vunpack.c.l.b16 %v721
  %v730 = vunpack.c.l.b16 %v722
  %v731 = vunpack.c.l.b16 %v723
  %v732 = vpack.c.b16 %v729, %v728
  %v733 = vpack.c.b16 %v731, %v730
  %vm736 = vcmask 261120
  %v738 = vsel %vm736, %v191, 0
  %v741 = vsel %vm736, %v192, 0
  %v744 = vsel %vm736, %v193, 0
  %v747 = vsel %vm736, %v194, 0
  %v750 = vsel %vm736, %v195, 0
  %v753 = vsel %vm736, %v196, 0
  %v756 = vsel %vm736, %v197, 0
  %v759 = vsel %vm736, %v198, 0
  %v762 = vsel %vm736, %v199, 0
  %v765 = vsel %vm736, %v200, 0
  %v768 = vsel %vm736, %v201, 0
  %v771 = vsel %vm736, %v202, 0
  %v774 = vsel %vm736, %v203, 0
  %v777 = vsel %vm736, %v204, 0
  %v780 = vsel %vm736, %v205, 0
  %v783 = vsel %vm736, %v206, 0
  %v786 = vsel %vm736, %v207, 0
  %v789 = vsel %vm736, %v208, 0
  %v792 = vsel %vm736, %v209, 0
  %794 = vmatprep.subr.bf16.mxu0 0
  %795 = vmatpush1.bf16.msra.mxu0 0
  %796 = vmatprep.subr.bf16.mxu0 0
  %797 = vmatpush1.bf16.msra.mxu0 0
  %798 = vmatprep.subr.bf16.mxu0 0
  %799 = vmatpush1.bf16.msra.mxu0 0
  %800 = vmatprep.subr.bf16.mxu0 0
  %801 = vmatpush1.bf16.msra.mxu0 0
  %802 = vmatprep.subr.bf16.mxu0 0
  %803 = vmatpush1.bf16.msra.mxu0 0
  %804 = vmatprep.subr.bf16.mxu0 0
  %805 = vmatpush1.bf16.msra.mxu0 0
  %806 = vmatprep.subr.bf16.mxu0 0
  %807 = vmatpush1.bf16.msra.mxu0 %v733
  %808 = vmatprep.subr.bf16.mxu0 0
  %809 = vmatpush1.bf16.msra.mxu0 %v732
  %810 = vmatprep.subr.bf16.mxu0 0
  %811 = vmatpush2.bf16.msra.mxu0 0
  %812 = vmatprep.subr.bf16.mxu0 0
  %813 = vmatpush2.bf16.msra.mxu0 0
  %814 = vmatprep.subr.bf16.mxu0 0
  %815 = vmatpush2.bf16.msra.mxu0 0
  %816 = vmatprep.subr.bf16.mxu0 0
  %817 = vmatpush2.bf16.msra.mxu0 0
  %818 = vmatprep.subr.bf16.mxu0 0
  %819 = vmatpush2.bf16.msra.mxu0 0
  %820 = vmatprep.subr.bf16.mxu0 0
  %821 = vmatpush2.bf16.msra.mxu0 0
  %822 = vmatprep.subr.bf16.mxu0 0
  %823 = vmatpush2.bf16.msra.mxu0 0
  %824 = vmatprep.subr.bf16.mxu0 0
  %825 = vmatpush2.bf16.msra.mxu0 0
  %826 = vmatprep.mubr.bf16.mxu0 0
  %827 = vmatmul.mubr.bf16.gmra.mxu0 %v738
  %v828 = vpop.f32.mrf.mxu0
  %v829 = vadd.f32 0.0, %v828
  %v830 = vpop.f32.mrf.mxu0
  %v831 = vpop.f32.mrf.mxu0
  %v832 = vadd.f32 0.0, %v831
  %v833 = vpop.f32.mrf.mxu0
  %834 = vmatprep.mubr.bf16.mxu0 0
  %835 = vmatmul.mubr.bf16.gmra.mxu0 %v741
  %v836 = vpop.f32.mrf.mxu0
  %v837 = vadd.f32 0.0, %v836
  %v838 = vpop.f32.mrf.mxu0
  %v839 = vpop.f32.mrf.mxu0
  %v840 = vadd.f32 0.0, %v839
  %v841 = vpop.f32.mrf.mxu0
  %842 = vmatprep.mubr.bf16.mxu0 0
  %843 = vmatmul.mubr.bf16.gmra.mxu0 %v744
  %v844 = vpop.f32.mrf.mxu0
  %v845 = vadd.f32 0.0, %v844
  %v846 = vpop.f32.mrf.mxu0
  %v847 = vpop.f32.mrf.mxu0
  %v848 = vadd.f32 0.0, %v847
  %v849 = vpop.f32.mrf.mxu0
  %850 = vmatprep.mubr.bf16.mxu0 0
  %851 = vmatmul.mubr.bf16.gmra.mxu0 %v747
  %v852 = vpop.f32.mrf.mxu0
  %v853 = vadd.f32 0.0, %v852
  %v854 = vpop.f32.mrf.mxu0
  %v855 = vpop.f32.mrf.mxu0
  %v856 = vadd.f32 0.0, %v855
  %v857 = vpop.f32.mrf.mxu0
  %858 = vmatprep.mubr.bf16.mxu0 0
  %859 = vmatmul.mubr.bf16.gmra.mxu0 %v750
  %v860 = vpop.f32.mrf.mxu0
  %v861 = vadd.f32 0.0, %v860
  %v862 = vpop.f32.mrf.mxu0
  %v863 = vpop.f32.mrf.mxu0
  %v864 = vadd.f32 0.0, %v863
  %v865 = vpop.f32.mrf.mxu0
  %866 = vmatprep.mubr.bf16.mxu0 0
  %867 = vmatmul.mubr.bf16.gmra.mxu0 %v753
  %v868 = vpop.f32.mrf.mxu0
  %v869 = vadd.f32 0.0, %v868
  %v870 = vpop.f32.mrf.mxu0
  %v871 = vpop.f32.mrf.mxu0
  %v872 = vadd.f32 0.0, %v871
  %v873 = vpop.f32.mrf.mxu0
  %874 = vmatprep.mubr.bf16.mxu0 0
  %875 = vmatmul.mubr.bf16.gmra.mxu0 %v756
  %v876 = vpop.f32.mrf.mxu0
  %v877 = vadd.f32 0.0, %v876
  %v878 = vpop.f32.mrf.mxu0
  %v879 = vpop.f32.mrf.mxu0
  %v880 = vadd.f32 0.0, %v879
  %v881 = vpop.f32.mrf.mxu0
  %882 = vmatprep.mubr.bf16.mxu0 0
  %883 = vmatmul.mubr.bf16.gmra.mxu0 %v759
  %v884 = vpop.f32.mrf.mxu0
  %v885 = vadd.f32 0.0, %v884
  %v886 = vpop.f32.mrf.mxu0
  %v887 = vpop.f32.mrf.mxu0
  %v888 = vadd.f32 0.0, %v887
  %v889 = vpop.f32.mrf.mxu0
  %890 = vmatprep.mubr.bf16.mxu0 0
  %891 = vmatmul.mubr.bf16.gmra.mxu0 %v762
  %v892 = vpop.f32.mrf.mxu0
  %v893 = vadd.f32 0.0, %v892
  %v894 = vpop.f32.mrf.mxu0
  %v895 = vpop.f32.mrf.mxu0
  %v896 = vadd.f32 0.0, %v895
  %v897 = vpop.f32.mrf.mxu0
  %898 = vmatprep.mubr.bf16.mxu0 0
  %899 = vmatmul.mubr.bf16.gmra.mxu0 %v765
  %v900 = vpop.f32.mrf.mxu0
  %v901 = vadd.f32 0.0, %v900
  %v902 = vpop.f32.mrf.mxu0
  %v903 = vpop.f32.mrf.mxu0
  %v904 = vadd.f32 0.0, %v903
  %v905 = vpop.f32.mrf.mxu0
  %906 = vmatprep.mubr.bf16.mxu0 0
  %907 = vmatmul.mubr.bf16.gmra.mxu0 %v768
  %v908 = vpop.f32.mrf.mxu0
  %v909 = vadd.f32 0.0, %v908
  %v910 = vpop.f32.mrf.mxu0
  %v911 = vpop.f32.mrf.mxu0
  %v912 = vadd.f32 0.0, %v911
  %v913 = vpop.f32.mrf.mxu0
  %914 = vmatprep.mubr.bf16.mxu0 0
  %915 = vmatmul.mubr.bf16.gmra.mxu0 %v771
  %v916 = vpop.f32.mrf.mxu0
  %v917 = vadd.f32 0.0, %v916
  %v918 = vpop.f32.mrf.mxu0
  %v919 = vpop.f32.mrf.mxu0
  %v920 = vadd.f32 0.0, %v919
  %v921 = vpop.f32.mrf.mxu0
  %922 = vmatprep.mubr.bf16.mxu0 0
  %923 = vmatmul.mubr.bf16.gmra.mxu0 %v774
  %v924 = vpop.f32.mrf.mxu0
  %v925 = vadd.f32 0.0, %v924
  %v926 = vpop.f32.mrf.mxu0
  %v927 = vpop.f32.mrf.mxu0
  %v928 = vadd.f32 0.0, %v927
  %v929 = vpop.f32.mrf.mxu0
  %930 = vmatprep.mubr.bf16.mxu0 0
  %931 = vmatmul.mubr.bf16.gmra.mxu0 %v777
  %v932 = vpop.f32.mrf.mxu0
  %v933 = vadd.f32 0.0, %v932
  %v934 = vpop.f32.mrf.mxu0
  %v935 = vpop.f32.mrf.mxu0
  %v936 = vadd.f32 0.0, %v935
  %v937 = vpop.f32.mrf.mxu0
  %938 = vmatprep.mubr.bf16.mxu0 0
  %939 = vmatmul.mubr.bf16.gmra.mxu0 %v780
  %v940 = vpop.f32.mrf.mxu0
  %v941 = vadd.f32 0.0, %v940
  %v942 = vpop.f32.mrf.mxu0
  %v943 = vpop.f32.mrf.mxu0
  %v944 = vadd.f32 0.0, %v943
  %v945 = vpop.f32.mrf.mxu0
  %946 = vmatprep.mubr.bf16.mxu0 0
  %947 = vmatmul.mubr.bf16.gmra.mxu0 %v783
  %v948 = vpop.f32.mrf.mxu0
  %v949 = vadd.f32 0.0, %v948
  %v950 = vpop.f32.mrf.mxu0
  %v951 = vpop.f32.mrf.mxu0
  %v952 = vadd.f32 0.0, %v951
  %v953 = vpop.f32.mrf.mxu0
  %954 = vmatprep.mubr.bf16.mxu0 0
  %955 = vmatmul.mubr.bf16.gmra.mxu0 %v786
  %v956 = vpop.f32.mrf.mxu0
  %v957 = vadd.f32 0.0, %v956
  %v958 = vpop.f32.mrf.mxu0
  %v959 = vpop.f32.mrf.mxu0
  %v960 = vadd.f32 0.0, %v959
  %v961 = vpop.f32.mrf.mxu0
  %962 = vmatprep.mubr.bf16.mxu0 0
  %963 = vmatmul.mubr.bf16.gmra.mxu0 %v789
  %v964 = vpop.f32.mrf.mxu0
  %v965 = vadd.f32 0.0, %v964
  %v966 = vpop.f32.mrf.mxu0
  %v967 = vpop.f32.mrf.mxu0
  %v968 = vadd.f32 0.0, %v967
  %v969 = vpop.f32.mrf.mxu0
  %970 = vmatprep.mubr.bf16.mxu0 0
  %971 = vmatmul.mubr.bf16.gmra.mxu0 %v792
  %v972 = vpop.f32.mrf.mxu0
  %v973 = vadd.f32 0.0, %v972
  %v974 = vpop.f32.mrf.mxu0
  %v975 = vpop.f32.mrf.mxu0
  %v976 = vadd.f32 0.0, %v975
  %v977 = vpop.f32.mrf.mxu0
  %978 = vdwg.mxu0
  %v979 = vadd.f32 %v570, %v829
  %v980 = vadd.f32 %v573, %v832
  %v981 = vadd.f32 %v578, %v837
  %v982 = vadd.f32 %v581, %v840
  %v983 = vadd.f32 %v586, %v845
  %v984 = vadd.f32 %v589, %v848
  %v985 = vadd.f32 %v594, %v853
  %v986 = vadd.f32 %v597, %v856
  %v987 = vadd.f32 %v602, %v861
  %v988 = vadd.f32 %v605, %v864
  %v989 = vadd.f32 %v610, %v869
  %v990 = vadd.f32 %v613, %v872
  %v991 = vadd.f32 %v618, %v877
  %v992 = vadd.f32 %v621, %v880
  %v993 = vadd.f32 %v626, %v885
  %v994 = vadd.f32 %v629, %v888
  %v995 = vadd.f32 %v634, %v893
  %v996 = vadd.f32 %v637, %v896
  %v997 = vadd.f32 %v642, %v901
  %v998 = vadd.f32 %v645, %v904
  %v999 = vadd.f32 %v650, %v909
  %v1000 = vadd.f32 %v653, %v912
  %v1001 = vadd.f32 %v658, %v917
  %v1002 = vadd.f32 %v661, %v920
  %v1003 = vadd.f32 %v666, %v925
  %v1004 = vadd.f32 %v669, %v928
  %v1005 = vadd.f32 %v674, %v933
  %v1006 = vadd.f32 %v677, %v936
  %v1007 = vadd.f32 %v682, %v941
  %v1008 = vadd.f32 %v685, %v944
  %v1009 = vadd.f32 %v690, %v949
  %v1010 = vadd.f32 %v693, %v952
  %v1011 = vadd.f32 %v698, %v957
  %v1012 = vadd.f32 %v701, %v960
  %v1013 = vadd.f32 %v706, %v965
  %v1014 = vadd.f32 %v709, %v968
  %v1015 = vadd.f32 %v714, %v973
  %v1016 = vadd.f32 %v717, %v976
  %v1017 = vld [vmem:[%s6] sm:$0x1]
  %v1018 = vld [vmem:[%s7] sm:$0xf]
  %v1019 = vld [vmem:[%s7 + $0x4] sm:$0xf]
  %v1020 = vld [vmem:[%s7 + $0x8] sm:$0xf]
  %v1021 = vld [vmem:[%s7 + $0xc] sm:$0xf]
  %v1022 = vld [vmem:[%s7 + $0x10] sm:$0xf]
  %v1023 = vld [vmem:[%s7 + $0x14] sm:$0xf]
  %v1024 = vld [vmem:[%s7 + $0x18] sm:$0xf]
  %v1025 = vld [vmem:[%s7 + $0x1c] sm:$0xf]
  %v1026 = vld [vmem:[%s7 + $0x20] sm:$0xf]
  %v1027 = vld [vmem:[%s7 + $0x24] sm:$0xf]
  %v1028 = vld [vmem:[%s7 + $0x28] sm:$0xf]
  %v1029 = vld [vmem:[%s7 + $0x2c] sm:$0xf]
  %v1030 = vld [vmem:[%s7 + $0x30] sm:$0xf]
  %v1031 = vld [vmem:[%s7 + $0x34] sm:$0xf]
  %v1032 = vld [vmem:[%s7 + $0x38] sm:$0xf]
  %v1033 = vld [vmem:[%s7 + $0x3c] sm:$0xf]
  %v1034 = vld [vmem:[%s8] sm:$0x1]
  %v1035 = vld [vmem:[%s9] sm:$0xf]
  %v1036 = vld [vmem:[%s9 + $0x4] sm:$0xf]
  %v1037 = vld [vmem:[%s9 + $0x8] sm:$0xf]
  %v1038 = vld [vmem:[%s9 + $0xc] sm:$0xf]
  %v1039 = vld [vmem:[%s9 + $0x10] sm:$0xf]
  %v1040 = vld [vmem:[%s9 + $0x14] sm:$0xf]
  %v1041 = vld [vmem:[%s9 + $0x18] sm:$0xf]
  %v1042 = vld [vmem:[%s9 + $0x1c] sm:$0xf]
  %v1043 = vld [vmem:[%s9 + $0x20] sm:$0xf]
  %v1044 = vld [vmem:[%s9 + $0x24] sm:$0xf]
  %v1045 = vld [vmem:[%s9 + $0x28] sm:$0xf]
  %v1046 = vld [vmem:[%s9 + $0x2c] sm:$0xf]
  %v1047 = vld [vmem:[%s9 + $0x30] sm:$0xf]
  %v1048 = vld [vmem:[%s9 + $0x34] sm:$0xf]
  %v1049 = vld [vmem:[%s9 + $0x38] sm:$0xf]
  %v1050 = vld [vmem:[%s9 + $0x3c] sm:$0xf]
  %v1051 = vld [vmem:[%s10] sm:$0x1]
  %v1053 = vlaneseq
  %v1054 = vshrl.u32 %v1053, 7
  %v1055 = vsub.s32 0, %v1054
  %v1056 = vrot.slane %v1017, %v1055
  %v1058 = vadd.f32 %v979, %v1056
  %v1059 = vadd.f32 %v980, %v1056
  %v1060 = vadd.f32 %v981, %v1056
  %v1061 = vadd.f32 %v982, %v1056
  %v1062 = vadd.f32 %v983, %v1056
  %v1063 = vadd.f32 %v984, %v1056
  %v1064 = vadd.f32 %v985, %v1056
  %v1065 = vadd.f32 %v986, %v1056
  %v1066 = vadd.f32 %v987, %v1056
  %v1067 = vadd.f32 %v988, %v1056
  %v1068 = vadd.f32 %v989, %v1056
  %v1069 = vadd.f32 %v990, %v1056
  %v1070 = vadd.f32 %v991, %v1056
  %v1071 = vadd.f32 %v992, %v1056
  %v1072 = vadd.f32 %v993, %v1056
  %v1073 = vadd.f32 %v994, %v1056
  %v1074 = vadd.f32 %v995, %v1056
  %v1075 = vadd.f32 %v996, %v1056
  %v1076 = vadd.f32 %v997, %v1056
  %v1077 = vadd.f32 %v998, %v1056
  %v1078 = vadd.f32 %v999, %v1056
  %v1079 = vadd.f32 %v1000, %v1056
  %v1080 = vadd.f32 %v1001, %v1056
  %v1081 = vadd.f32 %v1002, %v1056
  %v1082 = vadd.f32 %v1003, %v1056
  %v1083 = vadd.f32 %v1004, %v1056
  %v1084 = vadd.f32 %v1005, %v1056
  %v1085 = vadd.f32 %v1006, %v1056
  %v1086 = vadd.f32 %v1007, %v1056
  %v1087 = vadd.f32 %v1008, %v1056
  %v1088 = vadd.f32 %v1009, %v1056
  %v1089 = vadd.f32 %v1010, %v1056
  %v1090 = vadd.f32 %v1011, %v1056
  %v1091 = vadd.f32 %v1012, %v1056
  %v1092 = vadd.f32 %v1013, %v1056
  %v1093 = vadd.f32 %v1014, %v1056
  %v1094 = vadd.f32 %v1015, %v1056
  %v1095 = vadd.f32 %v1016, %v1056
  %v1096 = vmax.f32 %v1058, 0.0
  %v1097 = vmax.f32 %v1059, 0.0
  %v1098 = vmax.f32 %v1060, 0.0
  %v1099 = vmax.f32 %v1061, 0.0
  %v1100 = vmax.f32 %v1062, 0.0
  %v1101 = vmax.f32 %v1063, 0.0
  %v1102 = vmax.f32 %v1064, 0.0
  %v1103 = vmax.f32 %v1065, 0.0
  %v1104 = vmax.f32 %v1066, 0.0
  %v1105 = vmax.f32 %v1067, 0.0
  %v1106 = vmax.f32 %v1068, 0.0
  %v1107 = vmax.f32 %v1069, 0.0
  %v1108 = vmax.f32 %v1070, 0.0
  %v1109 = vmax.f32 %v1071, 0.0
  %v1110 = vmax.f32 %v1072, 0.0
  %v1111 = vmax.f32 %v1073, 0.0
  %v1112 = vmax.f32 %v1074, 0.0
  %v1113 = vmax.f32 %v1075, 0.0
  %v1114 = vmax.f32 %v1076, 0.0
  %v1115 = vmax.f32 %v1077, 0.0
  %v1116 = vmax.f32 %v1078, 0.0
  %v1117 = vmax.f32 %v1079, 0.0
  %v1118 = vmax.f32 %v1080, 0.0
  %v1119 = vmax.f32 %v1081, 0.0
  %v1120 = vmax.f32 %v1082, 0.0
  %v1121 = vmax.f32 %v1083, 0.0
  %v1122 = vmax.f32 %v1084, 0.0
  %v1123 = vmax.f32 %v1085, 0.0
  %v1124 = vmax.f32 %v1086, 0.0
  %v1125 = vmax.f32 %v1087, 0.0
  %v1126 = vmax.f32 %v1088, 0.0
  %v1127 = vmax.f32 %v1089, 0.0
  %v1128 = vmax.f32 %v1090, 0.0
  %v1129 = vmax.f32 %v1091, 0.0
  %v1130 = vmax.f32 %v1092, 0.0
  %v1131 = vmax.f32 %v1093, 0.0
  %v1132 = vmax.f32 %v1094, 0.0
  %v1133 = vmax.f32 %v1095, 0.0
  %v1134 = vpack.c.bf16 %v1097, %v1096
  %v1135 = vpack.c.bf16 %v1099, %v1098
  %v1136 = vpack.c.bf16 %v1101, %v1100
  %v1137 = vpack.c.bf16 %v1103, %v1102
  %v1138 = vpack.c.bf16 %v1105, %v1104
  %v1139 = vpack.c.bf16 %v1107, %v1106
  %v1140 = vpack.c.bf16 %v1109, %v1108
  %v1141 = vpack.c.bf16 %v1111, %v1110
  %v1142 = vpack.c.bf16 %v1113, %v1112
  %v1143 = vpack.c.bf16 %v1115, %v1114
  %v1144 = vpack.c.bf16 %v1117, %v1116
  %v1145 = vpack.c.bf16 %v1119, %v1118
  %v1146 = vpack.c.bf16 %v1121, %v1120
  %v1147 = vpack.c.bf16 %v1123, %v1122
  %v1148 = vpack.c.bf16 %v1125, %v1124
  %v1149 = vpack.c.bf16 %v1127, %v1126
  %v1150 = vpack.c.bf16 %v1129, %v1128
  %v1151 = vpack.c.bf16 %v1131, %v1130
  %v1152 = vpack.c.bf16 %v1133, %v1132
  %v1154 = vlaneseq
  %v1155 = vshrl.u32 %v1154, 7
  %v1156 = vsub.s32 0, %v1155
  %v1157 = vrot.slane %v1034, %v1156
  %v1175 = vunpack.c.l.b16 %v1018
  %v1176 = vunpack.c.l.b16 %v1019
  %v1177 = vunpack.c.l.b16 %v1020
  %v1178 = vunpack.c.l.b16 %v1021
  %v1179 = vunpack.c.l.b16 %v1022
  %v1180 = vunpack.c.l.b16 %v1023
  %v1181 = vunpack.c.l.b16 %v1024
  %v1182 = vunpack.c.l.b16 %v1025
  %v1183 = vunpack.c.l.b16 %v1026
  %v1184 = vunpack.c.l.b16 %v1027
  %v1185 = vunpack.c.l.b16 %v1028
  %v1186 = vunpack.c.l.b16 %v1029
  %v1187 = vunpack.c.l.b16 %v1030
  %v1188 = vunpack.c.l.b16 %v1031
  %v1189 = vunpack.c.l.b16 %v1032
  %v1190 = vunpack.c.l.b16 %v1033
  %v1191 = vpack.c.b16 %v1176, %v1175
  %v1192 = vpack.c.b16 %v1178, %v1177
  %v1193 = vpack.c.b16 %v1180, %v1179
  %v1194 = vpack.c.b16 %v1182, %v1181
  %v1195 = vpack.c.b16 %v1184, %v1183
  %v1196 = vpack.c.b16 %v1186, %v1185
  %v1197 = vpack.c.b16 %v1188, %v1187
  %v1198 = vpack.c.b16 %v1190, %v1189
  %1207 = vmatprep.subr.bf16.mxu0 0
  %1208 = vmatpush1.bf16.msra.mxu0 %v1198
  %1209 = vmatprep.subr.bf16.mxu0 0
  %1210 = vmatpush1.bf16.msra.mxu0 %v1197
  %1211 = vmatprep.subr.bf16.mxu0 0
  %1212 = vmatpush1.bf16.msra.mxu0 %v1196
  %1213 = vmatprep.subr.bf16.mxu0 0
  %1214 = vmatpush1.bf16.msra.mxu0 %v1195
  %1215 = vmatprep.subr.bf16.mxu0 0
  %1216 = vmatpush1.bf16.msra.mxu0 %v1194
  %1217 = vmatprep.subr.bf16.mxu0 0
  %1218 = vmatpush1.bf16.msra.mxu0 %v1193
  %1219 = vmatprep.subr.bf16.mxu0 0
  %1220 = vmatpush1.bf16.msra.mxu0 %v1192
  %1221 = vmatprep.subr.bf16.mxu0 0
  %1222 = vmatpush1.bf16.msra.mxu0 %v1191
  %1223 = vmatprep.subr.bf16.mxu0 0
  %1224 = vmatpush2.bf16.msra.mxu0 0
  %1225 = vmatprep.subr.bf16.mxu0 0
  %1226 = vmatpush2.bf16.msra.mxu0 0
  %1227 = vmatprep.subr.bf16.mxu0 0
  %1228 = vmatpush2.bf16.msra.mxu0 0
  %1229 = vmatprep.subr.bf16.mxu0 0
  %1230 = vmatpush2.bf16.msra.mxu0 0
  %1231 = vmatprep.subr.bf16.mxu0 0
  %1232 = vmatpush2.bf16.msra.mxu0 0
  %1233 = vmatprep.subr.bf16.mxu0 0
  %1234 = vmatpush2.bf16.msra.mxu0 0
  %1235 = vmatprep.subr.bf16.mxu0 0
  %1236 = vmatpush2.bf16.msra.mxu0 0
  %1237 = vmatprep.subr.bf16.mxu0 0
  %1238 = vmatpush2.bf16.msra.mxu0 0
  %1239 = vmatprep.mubr.bf16.mxu0 0
  %1240 = vmatmul.mubr.bf16.gmra.mxu0 %v1134
  %v1241 = vpop.f32.mrf.mxu0
  %v1242 = vadd.f32 %v1157, %v1241
  %v1243 = vpop.f32.mrf.mxu0
  %v1244 = vpop.f32.mrf.mxu0
  %v1245 = vadd.f32 %v1157, %v1244
  %v1246 = vpop.f32.mrf.mxu0
  %1247 = vmatprep.mubr.bf16.mxu0 0
  %1248 = vmatmul.mubr.bf16.gmra.mxu0 %v1135
  %v1249 = vpop.f32.mrf.mxu0
  %v1250 = vadd.f32 %v1157, %v1249
  %v1251 = vpop.f32.mrf.mxu0
  %v1252 = vpop.f32.mrf.mxu0
  %v1253 = vadd.f32 %v1157, %v1252
  %v1254 = vpop.f32.mrf.mxu0
  %1255 = vmatprep.mubr.bf16.mxu0 0
  %1256 = vmatmul.mubr.bf16.gmra.mxu0 %v1136
  %v1257 = vpop.f32.mrf.mxu0
  %v1258 = vadd.f32 %v1157, %v1257
  %v1259 = vpop.f32.mrf.mxu0
  %v1260 = vpop.f32.mrf.mxu0
  %v1261 = vadd.f32 %v1157, %v1260
  %v1262 = vpop.f32.mrf.mxu0
  %1263 = vmatprep.mubr.bf16.mxu0 0
  %1264 = vmatmul.mubr.bf16.gmra.mxu0 %v1137
  %v1265 = vpop.f32.mrf.mxu0
  %v1266 = vadd.f32 %v1157, %v1265
  %v1267 = vpop.f32.mrf.mxu0
  %v1268 = vpop.f32.mrf.mxu0
  %v1269 = vadd.f32 %v1157, %v1268
  %v1270 = vpop.f32.mrf.mxu0
  %1271 = vmatprep.mubr.bf16.mxu0 0
  %1272 = vmatmul.mubr.bf16.gmra.mxu0 %v1138
  %v1273 = vpop.f32.mrf.mxu0
  %v1274 = vadd.f32 %v1157, %v1273
  %v1275 = vpop.f32.mrf.mxu0
  %v1276 = vpop.f32.mrf.mxu0
  %v1277 = vadd.f32 %v1157, %v1276
  %v1278 = vpop.f32.mrf.mxu0
  %1279 = vmatprep.mubr.bf16.mxu0 0
  %1280 = vmatmul.mubr.bf16.gmra.mxu0 %v1139
  %v1281 = vpop.f32.mrf.mxu0
  %v1282 = vadd.f32 %v1157, %v1281
  %v1283 = vpop.f32.mrf.mxu0
  %v1284 = vpop.f32.mrf.mxu0
  %v1285 = vadd.f32 %v1157, %v1284
  %v1286 = vpop.f32.mrf.mxu0
  %1287 = vmatprep.mubr.bf16.mxu0 0
  %1288 = vmatmul.mubr.bf16.gmra.mxu0 %v1140
  %v1289 = vpop.f32.mrf.mxu0
  %v1290 = vadd.f32 %v1157, %v1289
  %v1291 = vpop.f32.mrf.mxu0
  %v1292 = vpop.f32.mrf.mxu0
  %v1293 = vadd.f32 %v1157, %v1292
  %v1294 = vpop.f32.mrf.mxu0
  %1295 = vmatprep.mubr.bf16.mxu0 0
  %1296 = vmatmul.mubr.bf16.gmra.mxu0 %v1141
  %v1297 = vpop.f32.mrf.mxu0
  %v1298 = vadd.f32 %v1157, %v1297
  %v1299 = vpop.f32.mrf.mxu0
  %v1300 = vpop.f32.mrf.mxu0
  %v1301 = vadd.f32 %v1157, %v1300
  %v1302 = vpop.f32.mrf.mxu0
  %1303 = vmatprep.mubr.bf16.mxu0 0
  %1304 = vmatmul.mubr.bf16.gmra.mxu0 %v1142
  %v1305 = vpop.f32.mrf.mxu0
  %v1306 = vadd.f32 %v1157, %v1305
  %v1307 = vpop.f32.mrf.mxu0
  %v1308 = vpop.f32.mrf.mxu0
  %v1309 = vadd.f32 %v1157, %v1308
  %v1310 = vpop.f32.mrf.mxu0
  %1311 = vmatprep.mubr.bf16.mxu0 0
  %1312 = vmatmul.mubr.bf16.gmra.mxu0 %v1143
  %v1313 = vpop.f32.mrf.mxu0
  %v1314 = vadd.f32 %v1157, %v1313
  %v1315 = vpop.f32.mrf.mxu0
  %v1316 = vpop.f32.mrf.mxu0
  %v1317 = vadd.f32 %v1157, %v1316
  %v1318 = vpop.f32.mrf.mxu0
  %1319 = vmatprep.mubr.bf16.mxu0 0
  %1320 = vmatmul.mubr.bf16.gmra.mxu0 %v1144
  %v1321 = vpop.f32.mrf.mxu0
  %v1322 = vadd.f32 %v1157, %v1321
  %v1323 = vpop.f32.mrf.mxu0
  %v1324 = vpop.f32.mrf.mxu0
  %v1325 = vadd.f32 %v1157, %v1324
  %v1326 = vpop.f32.mrf.mxu0
  %1327 = vmatprep.mubr.bf16.mxu0 0
  %1328 = vmatmul.mubr.bf16.gmra.mxu0 %v1145
  %v1329 = vpop.f32.mrf.mxu0
  %v1330 = vadd.f32 %v1157, %v1329
  %v1331 = vpop.f32.mrf.mxu0
  %v1332 = vpop.f32.mrf.mxu0
  %v1333 = vadd.f32 %v1157, %v1332
  %v1334 = vpop.f32.mrf.mxu0
  %1335 = vmatprep.mubr.bf16.mxu0 0
  %1336 = vmatmul.mubr.bf16.gmra.mxu0 %v1146
  %v1337 = vpop.f32.mrf.mxu0
  %v1338 = vadd.f32 %v1157, %v1337
  %v1339 = vpop.f32.mrf.mxu0
  %v1340 = vpop.f32.mrf.mxu0
  %v1341 = vadd.f32 %v1157, %v1340
  %v1342 = vpop.f32.mrf.mxu0
  %1343 = vmatprep.mubr.bf16.mxu0 0
  %1344 = vmatmul.mubr.bf16.gmra.mxu0 %v1147
  %v1345 = vpop.f32.mrf.mxu0
  %v1346 = vadd.f32 %v1157, %v1345
  %v1347 = vpop.f32.mrf.mxu0
  %v1348 = vpop.f32.mrf.mxu0
  %v1349 = vadd.f32 %v1157, %v1348
  %v1350 = vpop.f32.mrf.mxu0
  %1351 = vmatprep.mubr.bf16.mxu0 0
  %1352 = vmatmul.mubr.bf16.gmra.mxu0 %v1148
  %v1353 = vpop.f32.mrf.mxu0
  %v1354 = vadd.f32 %v1157, %v1353
  %v1355 = vpop.f32.mrf.mxu0
  %v1356 = vpop.f32.mrf.mxu0
  %v1357 = vadd.f32 %v1157, %v1356
  %v1358 = vpop.f32.mrf.mxu0
  %1359 = vmatprep.mubr.bf16.mxu0 0
  %1360 = vmatmul.mubr.bf16.gmra.mxu0 %v1149
  %v1361 = vpop.f32.mrf.mxu0
  %v1362 = vadd.f32 %v1157, %v1361
  %v1363 = vpop.f32.mrf.mxu0
  %v1364 = vpop.f32.mrf.mxu0
  %v1365 = vadd.f32 %v1157, %v1364
  %v1366 = vpop.f32.mrf.mxu0
  %1367 = vmatprep.mubr.bf16.mxu0 0
  %1368 = vmatmul.mubr.bf16.gmra.mxu0 %v1150
  %v1369 = vpop.f32.mrf.mxu0
  %v1370 = vadd.f32 %v1157, %v1369
  %v1371 = vpop.f32.mrf.mxu0
  %v1372 = vpop.f32.mrf.mxu0
  %v1373 = vadd.f32 %v1157, %v1372
  %v1374 = vpop.f32.mrf.mxu0
  %1375 = vmatprep.mubr.bf16.mxu0 0
  %1376 = vmatmul.mubr.bf16.gmra.mxu0 %v1151
  %v1377 = vpop.f32.mrf.mxu0
  %v1378 = vadd.f32 %v1157, %v1377
  %v1379 = vpop.f32.mrf.mxu0
  %v1380 = vpop.f32.mrf.mxu0
  %v1381 = vadd.f32 %v1157, %v1380
  %v1382 = vpop.f32.mrf.mxu0
  %1383 = vmatprep.mubr.bf16.mxu0 0
  %1384 = vmatmul.mubr.bf16.gmra.mxu0 %v1152
  %v1385 = vpop.f32.mrf.mxu0
  %v1386 = vadd.f32 %v1157, %v1385
  %v1387 = vpop.f32.mrf.mxu0
  %v1388 = vpop.f32.mrf.mxu0
  %v1389 = vadd.f32 %v1157, %v1388
  %v1390 = vpop.f32.mrf.mxu0
  %1391 = vdwg.mxu0
  %v1392 = vmax.f32 %v1242, 0.0
  %v1393 = vmax.f32 %v1245, 0.0
  %v1394 = vmax.f32 %v1250, 0.0
  %v1395 = vmax.f32 %v1253, 0.0
  %v1396 = vmax.f32 %v1258, 0.0
  %v1397 = vmax.f32 %v1261, 0.0
  %v1398 = vmax.f32 %v1266, 0.0
  %v1399 = vmax.f32 %v1269, 0.0
  %v1400 = vmax.f32 %v1274, 0.0
  %v1401 = vmax.f32 %v1277, 0.0
  %v1402 = vmax.f32 %v1282, 0.0
  %v1403 = vmax.f32 %v1285, 0.0
  %v1404 = vmax.f32 %v1290, 0.0
  %v1405 = vmax.f32 %v1293, 0.0
  %v1406 = vmax.f32 %v1298, 0.0
  %v1407 = vmax.f32 %v1301, 0.0
  %v1408 = vmax.f32 %v1306, 0.0
  %v1409 = vmax.f32 %v1309, 0.0
  %v1410 = vmax.f32 %v1314, 0.0
  %v1411 = vmax.f32 %v1317, 0.0
  %v1412 = vmax.f32 %v1322, 0.0
  %v1413 = vmax.f32 %v1325, 0.0
  %v1414 = vmax.f32 %v1330, 0.0
  %v1415 = vmax.f32 %v1333, 0.0
  %v1416 = vmax.f32 %v1338, 0.0
  %v1417 = vmax.f32 %v1341, 0.0
  %v1418 = vmax.f32 %v1346, 0.0
  %v1419 = vmax.f32 %v1349, 0.0
  %v1420 = vmax.f32 %v1354, 0.0
  %v1421 = vmax.f32 %v1357, 0.0
  %v1422 = vmax.f32 %v1362, 0.0
  %v1423 = vmax.f32 %v1365, 0.0
  %v1424 = vmax.f32 %v1370, 0.0
  %v1425 = vmax.f32 %v1373, 0.0
  %v1426 = vmax.f32 %v1378, 0.0
  %v1427 = vmax.f32 %v1381, 0.0
  %v1428 = vmax.f32 %v1386, 0.0
  %v1429 = vmax.f32 %v1389, 0.0
  %v1430 = vpack.c.bf16 %v1393, %v1392
  %v1431 = vpack.c.bf16 %v1395, %v1394
  %v1432 = vpack.c.bf16 %v1397, %v1396
  %v1433 = vpack.c.bf16 %v1399, %v1398
  %v1434 = vpack.c.bf16 %v1401, %v1400
  %v1435 = vpack.c.bf16 %v1403, %v1402
  %v1436 = vpack.c.bf16 %v1405, %v1404
  %v1437 = vpack.c.bf16 %v1407, %v1406
  %v1438 = vpack.c.bf16 %v1409, %v1408
  %v1439 = vpack.c.bf16 %v1411, %v1410
  %v1440 = vpack.c.bf16 %v1413, %v1412
  %v1441 = vpack.c.bf16 %v1415, %v1414
  %v1442 = vpack.c.bf16 %v1417, %v1416
  %v1443 = vpack.c.bf16 %v1419, %v1418
  %v1444 = vpack.c.bf16 %v1421, %v1420
  %v1445 = vpack.c.bf16 %v1423, %v1422
  %v1446 = vpack.c.bf16 %v1425, %v1424
  %v1447 = vpack.c.bf16 %v1427, %v1426
  %v1448 = vpack.c.bf16 %v1429, %v1428
  %v1450 = vlaneseq
  %v1451 = vshrl.u32 %v1450, 7
  %v1452 = vsub.s32 0, %v1451
  %v1453 = vrot.slane %v1051, %v1452
  %v1471 = vunpack.c.l.b16 %v1035
  %v1472 = vunpack.c.l.b16 %v1036
  %v1473 = vunpack.c.l.b16 %v1037
  %v1474 = vunpack.c.l.b16 %v1038
  %v1475 = vunpack.c.l.b16 %v1039
  %v1476 = vunpack.c.l.b16 %v1040
  %v1477 = vunpack.c.l.b16 %v1041
  %v1478 = vunpack.c.l.b16 %v1042
  %v1479 = vunpack.c.l.b16 %v1043
  %v1480 = vunpack.c.l.b16 %v1044
  %v1481 = vunpack.c.l.b16 %v1045
  %v1482 = vunpack.c.l.b16 %v1046
  %v1483 = vunpack.c.l.b16 %v1047
  %v1484 = vunpack.c.l.b16 %v1048
  %v1485 = vunpack.c.l.b16 %v1049
  %v1486 = vunpack.c.l.b16 %v1050
  %v1487 = vpack.c.b16 %v1472, %v1471
  %v1488 = vpack.c.b16 %v1474, %v1473
  %v1489 = vpack.c.b16 %v1476, %v1475
  %v1490 = vpack.c.b16 %v1478, %v1477
  %v1491 = vpack.c.b16 %v1480, %v1479
  %v1492 = vpack.c.b16 %v1482, %v1481
  %v1493 = vpack.c.b16 %v1484, %v1483
  %v1494 = vpack.c.b16 %v1486, %v1485
  %1503 = vmatprep.subr.bf16.mxu0 0
  %1504 = vmatpush1.bf16.msra.mxu0 %v1494
  %1505 = vmatprep.subr.bf16.mxu0 0
  %1506 = vmatpush1.bf16.msra.mxu0 %v1493
  %1507 = vmatprep.subr.bf16.mxu0 0
  %1508 = vmatpush1.bf16.msra.mxu0 %v1492
  %1509 = vmatprep.subr.bf16.mxu0 0
  %1510 = vmatpush1.bf16.msra.mxu0 %v1491
  %1511 = vmatprep.subr.bf16.mxu0 0
  %1512 = vmatpush1.bf16.msra.mxu0 %v1490
  %1513 = vmatprep.subr.bf16.mxu0 0
  %1514 = vmatpush1.bf16.msra.mxu0 %v1489
  %1515 = vmatprep.subr.bf16.mxu0 0
  %1516 = vmatpush1.bf16.msra.mxu0 %v1488
  %1517 = vmatprep.subr.bf16.mxu0 0
  %1518 = vmatpush1.bf16.msra.mxu0 %v1487
  %1519 = vmatprep.subr.bf16.mxu0 0
  %1520 = vmatpush2.bf16.msra.mxu0 0
  %1521 = vmatprep.subr.bf16.mxu0 0
  %1522 = vmatpush2.bf16.msra.mxu0 0
  %1523 = vmatprep.subr.bf16.mxu0 0
  %1524 = vmatpush2.bf16.msra.mxu0 0
  %1525 = vmatprep.subr.bf16.mxu0 0
  %1526 = vmatpush2.bf16.msra.mxu0 0
  %1527 = vmatprep.subr.bf16.mxu0 0
  %1528 = vmatpush2.bf16.msra.mxu0 0
  %1529 = vmatprep.subr.bf16.mxu0 0
  %1530 = vmatpush2.bf16.msra.mxu0 0
  %1531 = vmatprep.subr.bf16.mxu0 0
  %1532 = vmatpush2.bf16.msra.mxu0 0
  %1533 = vmatprep.subr.bf16.mxu0 0
  %1534 = vmatpush2.bf16.msra.mxu0 0
  %1535 = vmatprep.mubr.bf16.mxu0 0
  %1536 = vmatmul.mubr.bf16.gmra.mxu0 %v1430
  %v1537 = vpop.f32.mrf.mxu0
  %v1538 = vadd.f32 %v1453, %v1537
  %v1539 = vpop.f32.mrf.mxu0
  %v1540 = vpop.f32.mrf.mxu0
  %v1541 = vadd.f32 %v1453, %v1540
  %v1542 = vpop.f32.mrf.mxu0
  %1543 = vmatprep.mubr.bf16.mxu0 0
  %1544 = vmatmul.mubr.bf16.gmra.mxu0 %v1431
  %v1545 = vpop.f32.mrf.mxu0
  %v1546 = vadd.f32 %v1453, %v1545
  %v1547 = vpop.f32.mrf.mxu0
  %v1548 = vpop.f32.mrf.mxu0
  %v1549 = vadd.f32 %v1453, %v1548
  %v1550 = vpop.f32.mrf.mxu0
  %1551 = vmatprep.mubr.bf16.mxu0 0
  %1552 = vmatmul.mubr.bf16.gmra.mxu0 %v1432
  %v1553 = vpop.f32.mrf.mxu0
  %v1554 = vadd.f32 %v1453, %v1553
  %v1555 = vpop.f32.mrf.mxu0
  %v1556 = vpop.f32.mrf.mxu0
  %v1557 = vadd.f32 %v1453, %v1556
  %v1558 = vpop.f32.mrf.mxu0
  %1559 = vmatprep.mubr.bf16.mxu0 0
  %1560 = vmatmul.mubr.bf16.gmra.mxu0 %v1433
  %v1561 = vpop.f32.mrf.mxu0
  %v1562 = vadd.f32 %v1453, %v1561
  %v1563 = vpop.f32.mrf.mxu0
  %v1564 = vpop.f32.mrf.mxu0
  %v1565 = vadd.f32 %v1453, %v1564
  %v1566 = vpop.f32.mrf.mxu0
  %1567 = vmatprep.mubr.bf16.mxu0 0
  %1568 = vmatmul.mubr.bf16.gmra.mxu0 %v1434
  %v1569 = vpop.f32.mrf.mxu0
  %v1570 = vadd.f32 %v1453, %v1569
  %v1571 = vpop.f32.mrf.mxu0
  %v1572 = vpop.f32.mrf.mxu0
  %v1573 = vadd.f32 %v1453, %v1572
  %v1574 = vpop.f32.mrf.mxu0
  %1575 = vmatprep.mubr.bf16.mxu0 0
  %1576 = vmatmul.mubr.bf16.gmra.mxu0 %v1435
  %v1577 = vpop.f32.mrf.mxu0
  %v1578 = vadd.f32 %v1453, %v1577
  %v1579 = vpop.f32.mrf.mxu0
  %v1580 = vpop.f32.mrf.mxu0
  %v1581 = vadd.f32 %v1453, %v1580
  %v1582 = vpop.f32.mrf.mxu0
  %1583 = vmatprep.mubr.bf16.mxu0 0
  %1584 = vmatmul.mubr.bf16.gmra.mxu0 %v1436
  %v1585 = vpop.f32.mrf.mxu0
  %v1586 = vadd.f32 %v1453, %v1585
  %v1587 = vpop.f32.mrf.mxu0
  %v1588 = vpop.f32.mrf.mxu0
  %v1589 = vadd.f32 %v1453, %v1588
  %v1590 = vpop.f32.mrf.mxu0
  %1591 = vmatprep.mubr.bf16.mxu0 0
  %1592 = vmatmul.mubr.bf16.gmra.mxu0 %v1437
  %v1593 = vpop.f32.mrf.mxu0
  %v1594 = vadd.f32 %v1453, %v1593
  %v1595 = vpop.f32.mrf.mxu0
  %v1596 = vpop.f32.mrf.mxu0
  %v1597 = vadd.f32 %v1453, %v1596
  %v1598 = vpop.f32.mrf.mxu0
  %1599 = vmatprep.mubr.bf16.mxu0 0
  %1600 = vmatmul.mubr.bf16.gmra.mxu0 %v1438
  %v1601 = vpop.f32.mrf.mxu0
  %v1602 = vadd.f32 %v1453, %v1601
  %v1603 = vpop.f32.mrf.mxu0
  %v1604 = vpop.f32.mrf.mxu0
  %v1605 = vadd.f32 %v1453, %v1604
  %v1606 = vpop.f32.mrf.mxu0
  %1607 = vmatprep.mubr.bf16.mxu0 0
  %1608 = vmatmul.mubr.bf16.gmra.mxu0 %v1439
  %v1609 = vpop.f32.mrf.mxu0
  %v1610 = vadd.f32 %v1453, %v1609
  %v1611 = vpop.f32.mrf.mxu0
  %v1612 = vpop.f32.mrf.mxu0
  %v1613 = vadd.f32 %v1453, %v1612
  %v1614 = vpop.f32.mrf.mxu0
  %1615 = vmatprep.mubr.bf16.mxu0 0
  %1616 = vmatmul.mubr.bf16.gmra.mxu0 %v1440
  %v1617 = vpop.f32.mrf.mxu0
  %v1618 = vadd.f32 %v1453, %v1617
  %v1619 = vpop.f32.mrf.mxu0
  %v1620 = vpop.f32.mrf.mxu0
  %v1621 = vadd.f32 %v1453, %v1620
  %v1622 = vpop.f32.mrf.mxu0
  %1623 = vmatprep.mubr.bf16.mxu0 0
  %1624 = vmatmul.mubr.bf16.gmra.mxu0 %v1441
  %v1625 = vpop.f32.mrf.mxu0
  %v1626 = vadd.f32 %v1453, %v1625
  %v1627 = vpop.f32.mrf.mxu0
  %v1628 = vpop.f32.mrf.mxu0
  %v1629 = vadd.f32 %v1453, %v1628
  %v1630 = vpop.f32.mrf.mxu0
  %1631 = vmatprep.mubr.bf16.mxu0 0
  %1632 = vmatmul.mubr.bf16.gmra.mxu0 %v1442
  %v1633 = vpop.f32.mrf.mxu0
  %v1634 = vadd.f32 %v1453, %v1633
  %v1635 = vpop.f32.mrf.mxu0
  %v1636 = vpop.f32.mrf.mxu0
  %v1637 = vadd.f32 %v1453, %v1636
  %v1638 = vpop.f32.mrf.mxu0
  %1639 = vmatprep.mubr.bf16.mxu0 0
  %1640 = vmatmul.mubr.bf16.gmra.mxu0 %v1443
  %v1641 = vpop.f32.mrf.mxu0
  %v1642 = vadd.f32 %v1453, %v1641
  %v1643 = vpop.f32.mrf.mxu0
  %v1644 = vpop.f32.mrf.mxu0
  %v1645 = vadd.f32 %v1453, %v1644
  %v1646 = vpop.f32.mrf.mxu0
  %1647 = vmatprep.mubr.bf16.mxu0 0
  %1648 = vmatmul.mubr.bf16.gmra.mxu0 %v1444
  %v1649 = vpop.f32.mrf.mxu0
  %v1650 = vadd.f32 %v1453, %v1649
  %v1651 = vpop.f32.mrf.mxu0
  %v1652 = vpop.f32.mrf.mxu0
  %v1653 = vadd.f32 %v1453, %v1652
  %v1654 = vpop.f32.mrf.mxu0
  %1655 = vmatprep.mubr.bf16.mxu0 0
  %1656 = vmatmul.mubr.bf16.gmra.mxu0 %v1445
  %v1657 = vpop.f32.mrf.mxu0
  %v1658 = vadd.f32 %v1453, %v1657
  %v1659 = vpop.f32.mrf.mxu0
  %v1660 = vpop.f32.mrf.mxu0
  %v1661 = vadd.f32 %v1453, %v1660
  %v1662 = vpop.f32.mrf.mxu0
  %1663 = vmatprep.mubr.bf16.mxu0 0
  %1664 = vmatmul.mubr.bf16.gmra.mxu0 %v1446
  %v1665 = vpop.f32.mrf.mxu0
  %v1666 = vadd.f32 %v1453, %v1665
  %v1667 = vpop.f32.mrf.mxu0
  %v1668 = vpop.f32.mrf.mxu0
  %v1669 = vadd.f32 %v1453, %v1668
  %v1670 = vpop.f32.mrf.mxu0
  %1671 = vmatprep.mubr.bf16.mxu0 0
  %1672 = vmatmul.mubr.bf16.gmra.mxu0 %v1447
  %v1673 = vpop.f32.mrf.mxu0
  %v1674 = vadd.f32 %v1453, %v1673
  %v1675 = vpop.f32.mrf.mxu0
  %v1676 = vpop.f32.mrf.mxu0
  %v1677 = vadd.f32 %v1453, %v1676
  %v1678 = vpop.f32.mrf.mxu0
  %1679 = vmatprep.mubr.bf16.mxu0 0
  %1680 = vmatmul.mubr.bf16.gmra.mxu0 %v1448
  %v1681 = vpop.f32.mrf.mxu0
  %v1682 = vadd.f32 %v1453, %v1681
  %v1683 = vpop.f32.mrf.mxu0
  %v1684 = vpop.f32.mrf.mxu0
  %v1685 = vadd.f32 %v1453, %v1684
  %v1686 = vpop.f32.mrf.mxu0
  %1687 = vdwg.mxu0
  %vm1688 = vcmask 64512
  %1689 = vst.msk [vmem:[%s11] sm:$0xff] %vm1688, %v1538
  %1690 = vst.msk [vmem:[%s11 + $0x8] sm:$0xff] %vm1688, %v1541
  %1691 = vst.msk [vmem:[%s11 + $0x10] sm:$0xff] %vm1688, %v1546
  %1692 = vst.msk [vmem:[%s11 + $0x18] sm:$0xff] %vm1688, %v1549
  %1693 = vst.msk [vmem:[%s11 + $0x20] sm:$0xff] %vm1688, %v1554
  %1694 = vst.msk [vmem:[%s11 + $0x28] sm:$0xff] %vm1688, %v1557
  %1695 = vst.msk [vmem:[%s11 + $0x30] sm:$0xff] %vm1688, %v1562
  %1696 = vst.msk [vmem:[%s11 + $0x38] sm:$0xff] %vm1688, %v1565
  %1697 = vst.msk [vmem:[%s11 + $0x40] sm:$0xff] %vm1688, %v1570
  %1698 = vst.msk [vmem:[%s11 + $0x48] sm:$0xff] %vm1688, %v1573
  %1699 = vst.msk [vmem:[%s11 + $0x50] sm:$0xff] %vm1688, %v1578
  %1700 = vst.msk [vmem:[%s11 + $0x58] sm:$0xff] %vm1688, %v1581
  %1701 = vst.msk [vmem:[%s11 + $0x60] sm:$0xff] %vm1688, %v1586
  %1702 = vst.msk [vmem:[%s11 + $0x68] sm:$0xff] %vm1688, %v1589
  %1703 = vst.msk [vmem:[%s11 + $0x70] sm:$0xff] %vm1688, %v1594
  %1704 = vst.msk [vmem:[%s11 + $0x78] sm:$0xff] %vm1688, %v1597
  %1705 = vst.msk [vmem:[%s11 + $0x80] sm:$0xff] %vm1688, %v1602
  %1706 = vst.msk [vmem:[%s11 + $0x88] sm:$0xff] %vm1688, %v1605
  %1707 = vst.msk [vmem:[%s11 + $0x90] sm:$0xff] %vm1688, %v1610
  %1708 = vst.msk [vmem:[%s11 + $0x98] sm:$0xff] %vm1688, %v1613
  %1709 = vst.msk [vmem:[%s11 + $0xa0] sm:$0xff] %vm1688, %v1618
  %1710 = vst.msk [vmem:[%s11 + $0xa8] sm:$0xff] %vm1688, %v1621
  %1711 = vst.msk [vmem:[%s11 + $0xb0] sm:$0xff] %vm1688, %v1626
  %1712 = vst.msk [vmem:[%s11 + $0xb8] sm:$0xff] %vm1688, %v1629
  %1713 = vst.msk [vmem:[%s11 + $0xc0] sm:$0xff] %vm1688, %v1634
  %1714 = vst.msk [vmem:[%s11 + $0xc8] sm:$0xff] %vm1688, %v1637
  %1715 = vst.msk [vmem:[%s11 + $0xd0] sm:$0xff] %vm1688, %v1642
  %1716 = vst.msk [vmem:[%s11 + $0xd8] sm:$0xff] %vm1688, %v1645
  %1717 = vst.msk [vmem:[%s11 + $0xe0] sm:$0xff] %vm1688, %v1650
  %1718 = vst.msk [vmem:[%s11 + $0xe8] sm:$0xff] %vm1688, %v1653
  %1719 = vst.msk [vmem:[%s11 + $0xf0] sm:$0xff] %vm1688, %v1658
  %1720 = vst.msk [vmem:[%s11 + $0xf8] sm:$0xff] %vm1688, %v1661
  %1721 = vst.msk [vmem:[%s11 + $0x100] sm:$0xff] %vm1688, %v1666
  %1722 = vst.msk [vmem:[%s11 + $0x108] sm:$0xff] %vm1688, %v1669
  %1723 = vst.msk [vmem:[%s11 + $0x110] sm:$0xff] %vm1688, %v1674
  %1724 = vst.msk [vmem:[%s11 + $0x118] sm:$0xff] %vm1688, %v1677
  %1725 = vst.msk [vmem:[%s11 + $0x120] sm:$0xff] %vm1688, %v1682
  %1726 = vst.msk [vmem:[%s11 + $0x128] sm:$0xff] %vm1688, %v1685
  // Predicated region
  $region46: #{embedding_model_forward.1} parent=0 // pred_check
    _
  $region47: #{embedding_model_forward.1} parent=0 // pred_check_branch
    %1728 = sbr.rel (0) target = $region49
  $region48: #{embedding_model_forward.1} parent=0 // pred_region
    _
  $region49: #{embedding_model_forward.1} parent=0 // pred_fallthru
    _
  // Predicated region
  $region50: #{embedding_model_forward.1} parent=0 // pred_check
    _
  $region51: #{embedding_model_forward.1} parent=0 // pred_check_branch
    %1730 = sbr.rel (0) target = $region53
  $region52: #{embedding_model_forward.1} parent=0 // pred_region
    _
  $region53: #{embedding_model_forward.1} parent=0 // pred_fallthru
    _

</llo_original>
